<compile_context>
chip_gen: v7x
topology: tpu7x:2x2x1
jax: 0.10.0
libtpu: 0.0.40
codegen_flags: <defaults>
</compile_context>

<pallas_src>
import functools
import numpy as np

import jax
import jax.numpy as jnp
from jax import lax
from jax.experimental import pallas as pl
from jax.experimental.pallas import tpu as pltpu

# ----------------------------- configuration --------------------------------
CIN = 3
C_BACKBONE = 16     # channels produced by the (stub) backbone
C_ENC = 8           # channels produced by the (stub) ASPP encoder
# The original module defines proj1 = Linear(num_classes, ...) but feeds it features
# with `predict.shape[1]` channels; num_classes == C_ENC keeps the forward consistent.
NUM_CLASSES = 8
PATCH_OUT_CHANNEL = NUM_CLASSES
PATCH_SIZE = 16
PATCH_NUM = 4
DOWN = 4            # spatial downsample of the backbone stub (output_stride analogue)
PACK = 16           # spatial positions packed into one 128-lane feature row
C_PAD = 128
assert PACK * C_ENC == C_PAD

_VMEM = pl.BlockSpec(memory_space=pltpu.MemorySpace.VMEM)
_SMEM = pl.BlockSpec(memory_space=pltpu.MemorySpace.SMEM)


# ----------------------------- Pallas kernels --------------------------------
def _backbone_encoder_head_kernel(x_ref, w1_ref, b1_ref, w2_ref, b2_ref,
                                  fold_ref, w1m_ref, w1v_ref, bp1_ref,
                                  wp2_ref, bp2_ref,
                                  feat_ref, qk_ref, s_acc, ss_acc, *, n_pos):
    """Fused (stub) backbone + encoder + pooled-mean/var head.

    x_ref   : (TILE_R, PACK*DOWN*DOWN*CIN) bf16 — PACK positions x folded pool window.
    feat_ref: (TILE_R, 128) f32 packed feature rows (PACK positions x C_ENC channels).
    qk_ref  : (8, 128) per-image proj output (row 0 is the real row), written on the
              last row tile of each image only.
    """
    t = pl.program_id(1)

    # Backbone conv (avg pool folded into W1) + encoder conv, block-diagonal over the
    # PACK packed positions; bf16 MXU operands, f32 accumulation.
    h1 = jnp.dot(x_ref[...], w1_ref[...], preferred_element_type=jnp.float32)
    h1 = jnp.maximum(h1 + b1_ref[...], 0.0)
    y = jnp.dot(h1.astype(jnp.bfloat16), w2_ref[...],
                preferred_element_type=jnp.float32)
    y = jnp.maximum(y + b2_ref[...], 0.0)            # (TILE_R, 128) packed, lane-dense
    feat_ref[...] = y                                 # single unmasked 128-lane store

    # Fused head: per-lane sum / sum-of-squares accumulated across row tiles.
    @pl.when(t == 0)
    def _init():
        s_acc[...] = jnp.zeros_like(s_acc)
        ss_acc[...] = jnp.zeros_like(ss_acc)

    s_acc[...] += jnp.sum(y, axis=0, keepdims=True)
    ss_acc[...] += jnp.sum(y * y, axis=0, keepdims=True)

    @pl.when(t == pl.num_programs(1) - 1)
    def _finalize():
        # Collapse the PACK position groups into per-channel totals on the MXU.
        S = jnp.dot(s_acc[...], fold_ref[...], preferred_element_type=jnp.float32)
        SS = jnp.dot(ss_acc[...], fold_ref[...], preferred_element_type=jnp.float32)
        mean = S * (1.0 / n_pos)
        # TODO(synk): single-pass unbiased var is cancellation-prone at real HW (~16k
        # positions); switch to per-tile compensated (Chan) combination at that scale.
        var = (SS - S * mean) * (1.0 / max(n_pos - 1, 1))
        # proj = Linear(cat([mean, var])) -> ReLU -> Linear ; split W1 into mean/var
        # halves so everything stays lane-dense.  Tiny (1,128) matmuls kept in f32.
        hh = jnp.dot(mean, w1m_ref[...], preferred_element_type=jnp.float32)
        hh = hh + jnp.dot(var, w1v_ref[...], preferred_element_type=jnp.float32)
        hh = jnp.maximum(hh + bp1_ref[...], 0.0)
        out = jnp.dot(hh, wp2_ref[...], preferred_element_type=jnp.float32) + bp2_ref[...]
        qk_ref[...] = jnp.broadcast_to(out, qk_ref.shape)


def _patch_proj1_kernel(idx_ref, feat_ref, gfold_ref, w1_ref, b1_ref, w2_ref, b2_ref,
                        o_ref, *, n_valid, t_pad, feat_h, feat_w, n_img):
    """Patch means (get_patch_q_k_multi_process1) + proj1, q1/k1 batched.

    feat_ref: (2*B, feat_h, feat_w*C_ENC) f32 — rows [0,B) are `predict`, [B,2B) are
              `predict1`; lane index = j*C_ENC + c.
    idx_ref : flat int32 SMEM, 9 values per patch: b, x1, x11, y1, y11, x2, x21, y2, y21.
    Every patch mean is two small matmuls (row-mask contraction, then a constant lane
    fold matrix), so the reduction rides the MXU; one dense (2*t_pad, 128) store.
    TODO(synk): at real feature sizes feed feat via memory_space=pl.ANY and DMA only the
    per-patch row windows (double-buffered) instead of holding the whole map in VMEM.
    """
    c = C_ENC
    row_i = lax.broadcasted_iota(jnp.int32, (1, feat_h), 1)
    lane_j = lax.broadcasted_iota(jnp.int32, (1, feat_w * c), 1) // c
    gfold = gfold_ref[...]                              # (feat_w*C, 128) constant fold

    def patch_mean(img, r0, r1, c0, c1):
        # Masks clip to [0, feat_h) / [0, feat_w) exactly like PyTorch slicing; the
        # divisor is the actual clipped element count.  (Fully-empty patches — which the
        # reference flags with print('error') — return 0 instead of NaN.)
        rmask = ((row_i >= r0) & (row_i < r1)).astype(jnp.float32)       # (1, h)
        cmask = ((lane_j >= c0) & (lane_j < c1)).astype(jnp.float32)     # (1, w*C)
        v = jnp.dot(rmask, feat_ref[img], preferred_element_type=jnp.float32)  # (1, w*C)
        s = jnp.dot(v * cmask, gfold, preferred_element_type=jnp.float32)      # (1, 128)
        nr = jnp.maximum(jnp.minimum(r1, feat_h) - jnp.maximum(r0, 0), 1)
        nc = jnp.maximum(jnp.minimum(c1, feat_w) - jnp.maximum(c0, 0), 1)
        return s * (1.0 / (nr * nc).astype(jnp.float32))

    rows = []

    def gather(img_off, o):
        for t in range(n_valid):                        # static, n_valid small
            b = idx_ref[9 * t + 0]
            rows.append(patch_mean(img_off + b,
                                   idx_ref[9 * t + 1 + o], idx_ref[9 * t + 2 + o],
                                   idx_ref[9 * t + 3 + o], idx_ref[9 * t + 4 + o]))
        if t_pad > n_valid:
            rows.append(jnp.zeros((t_pad - n_valid, C_PAD), jnp.float32))

    gather(0, 0)          # q1 patches from `predict`
    gather(n_img, 4)      # k1 patches from `predict1`

    x = jnp.concatenate(rows, axis=0)                   # (2*t_pad, 128), no scratch
    hh = jnp.dot(x, w1_ref[...], preferred_element_type=jnp.float32)
    hh = jnp.maximum(hh + b1_ref[...], 0.0)
    o_ref[...] = jnp.dot(hh, w2_ref[...], preferred_element_type=jnp.float32) + b2_ref[...]


# ----------------------------- parameters ------------------------------------
def init_params(key):
    def dense(k, din, dout, scale=0.1):
        kw, _ = jax.random.split(k)
        return (jax.random.normal(kw, (din, dout), jnp.float32) * scale,
                jnp.zeros((1, dout), jnp.float32))

    ks = jax.random.split(key, 6)
    p = {}
    p["backbone_w"], p["backbone_b"] = dense(ks[0], CIN, C_BACKBONE)
    p["encoder_w"], p["encoder_b"] = dense(ks[1], C_BACKBONE, C_ENC)
    # proj  = Linear(2*C, C) -> ReLU -> Linear(C, num_classes)
    p["proj_w1"], p["proj_b1"] = dense(ks[2], 2 * C_ENC, C_ENC)
    p["proj_w2"], p["proj_b2"] = dense(ks[3], C_ENC, NUM_CLASSES)
    # proj1 = Linear(num_classes, num_classes) -> ReLU -> Linear(num_classes, out)
    p["proj1_w1"], p["proj1_b1"] = dense(ks[4], NUM_CLASSES, NUM_CLASSES)
    p["proj1_w2"], p["proj1_b2"] = dense(ks[5], NUM_CLASSES, PATCH_OUT_CHANNEL)
    return p


def _pad2(x, rows, cols):
    return jnp.pad(x, ((0, rows - x.shape[0]), (0, cols - x.shape[1])))


def prepare_params(p):
    """Build folded / block-diagonal / padded device weights (one-time setup)."""
    pp = {}
    # Fold the DOWNxDOWN mean pool into the backbone pointwise conv, then expand both
    # pointwise convs to block-diagonal form over the PACK packed positions so the
    # matmul output *is* the packed 128-lane feature row (no padding, no in-kernel
    # reshape).  bf16 MXU operands, biases stay f32.
    w1_fold = jnp.tile(p["backbone_w"], (DOWN * DOWN, 1)) / float(DOWN * DOWN)   # (48,16)
    eye = jnp.eye(PACK, dtype=jnp.float32)
    pp["w1_block"] = jnp.kron(eye, w1_fold).astype(jnp.bfloat16)                 # (768,256)
    pp["b1_block"] = jnp.tile(p["backbone_b"], (1, PACK))                        # (1,256)
    pp["w2_block"] = jnp.kron(eye, p["encoder_w"]).astype(jnp.bfloat16)          # (256,128)
    pp["b2_block"] = jnp.tile(p["encoder_b"], (1, PACK))                         # (1,128)

    # Head: constant fold matrix collapsing the PACK packed position groups into
    # per-channel totals (rides the MXU in the epilogue).
    fold = np.zeros((C_PAD, C_PAD), np.float32)
    for pos in range(PACK):
        for ch in range(C_ENC):
            fold[pos * C_ENC + ch, ch] = 1.0
    pp["fold"] = jnp.asarray(fold)

    # proj weights split into mean/var halves, zero-padded to 128 lanes (padded lanes
    # are exactly zero end-to-end, so results are unchanged).
    pp["proj_w1m"] = _pad2(p["proj_w1"][:C_ENC], C_PAD, C_PAD)
    pp["proj_w1v"] = _pad2(p["proj_w1"][C_ENC:], C_PAD, C_PAD)
    pp["proj_b1p"] = _pad2(p["proj_b1"], 1, C_PAD)
    pp["proj_w2p"] = _pad2(p["proj_w2"], C_PAD, C_PAD)
    pp["proj_b2p"] = _pad2(p["proj_b2"], 1, C_PAD)
    pp["proj1_w1p"] = _pad2(p["proj1_w1"], C_PAD, C_PAD)
    pp["proj1_b1p"] = _pad2(p["proj1_b1"], 1, C_PAD)
    pp["proj1_w2p"] = _pad2(p["proj1_w2"], C_PAD, C_PAD)
    pp["proj1_b2p"] = _pad2(p["proj1_b2"], 1, C_PAD)
    return pp


# ----------------------------- host-side index parsing -----------------------
def build_patch_index(index_np, feat_h, feat_w, in_h, in_w, patch_size):
    """Faithful reproduction of get_patch_q_k1 coordinate math (including the
    reference's use of ratio1 for both half-lengths and Python round()).  Emits raw
    (possibly out-of-range) slice bounds; the kernel clips them exactly like PyTorch
    slicing, so per-patch sizes need not be uniform and no clamping is applied here.
    TODO(synk): negative start coords would wrap in PyTorch slicing (flagged 'error'
    by the reference); here they clip at 0."""
    ratio1 = float(feat_h) / float(in_h)
    ratio2 = float(feat_w) / float(in_w)
    half1 = patch_size / 2.0 * ratio1
    half2 = patch_size / 2.0 * ratio1
    entries = []
    for i in range(index_np.shape[0]):
        for j in range(index_np.shape[1]):
            if index_np[i, j, 0] != 0:
                x1 = round(index_np[i, j, 0] * ratio1 - half1)
                x11 = round(index_np[i, j, 0] * ratio1 + half1)
                y1 = round(index_np[i, j, 1] * ratio2 - half2)
                y11 = round(index_np[i, j, 1] * ratio2 + half2)
                x2 = round(index_np[i, j, 2] * ratio1 - half1)
                x21 = round(index_np[i, j, 2] * ratio1 + half1)
                y2 = round(index_np[i, j, 3] * ratio2 - half2)
                y21 = round(index_np[i, j, 3] * ratio2 + half2)
                entries.append((i, int(x1), int(x11), int(y1), int(y11),
                                int(x2), int(x21), int(y2), int(y21)))
    assert entries, "need at least one valid index entry"
    return np.asarray(entries, dtype=np.int32)


# ----------------------------- forward ----------------------------------------
def deeplab_forward(pp, inp, inp1, index_np, patch_size=PATCH_SIZE):
    B, cin, H, W = inp.shape
    assert cin == CIN and H % DOWN == 0 and W % DOWN == 0
    h, w = H // DOWN, W // DOWN
    n_pos = h * w
    assert n_pos % PACK == 0, "feature map positions must pack into 128-lane rows"
    rpi = n_pos // PACK                 # packed feature rows per image
    B2 = 2 * B
    kin = PACK * DOWN * DOWN * cin      # 768

    # NCHW -> NHWC, both images stacked on the batch axis; fold the DOWNxDOWN pool
    # window and PACK positions into the lane dim so the kernel input is lane-dense.
    x_all = jnp.transpose(jnp.concatenate([inp, inp1], axis=0), (0, 2, 3, 1))
    x_pack = (x_all.reshape(B2, h, DOWN, w, DOWN, cin)
                    .transpose(0, 1, 3, 2, 4, 5)
                    .reshape(B2, rpi, kin)
                    .astype(jnp.bfloat16))

    tile_r = rpi if rpi <= 512 else 512
    assert rpi % tile_r == 0, "TODO(synk): ragged last row tile"
    n_tiles = rpi // tile_r

    def wspec(arr):
        return pl.BlockSpec(arr.shape, lambda b, t: (0, 0))

    kern_a = functools.partial(_backbone_encoder_head_kernel, n_pos=n_pos)
    feat_packed, qk8 = pl.pallas_call(
        kern_a,
        grid=(B2, n_tiles),
        in_specs=[
            pl.BlockSpec((None, tile_r, kin), lambda b, t: (b, t, 0)),
            wspec(pp["w1_block"]), wspec(pp["b1_block"]),
            wspec(pp["w2_block"]), wspec(pp["b2_block"]),
            wspec(pp["fold"]),
            wspec(pp["proj_w1m"]), wspec(pp["proj_w1v"]), wspec(pp["proj_b1p"]),
            wspec(pp["proj_w2p"]), wspec(pp["proj_b2p"]),
        ],
        out_shape=(jax.ShapeDtypeStruct((B2, rpi, C_PAD), jnp.float32),
                   jax.ShapeDtypeStruct((B2, 8, C_PAD), jnp.float32)),
        out_specs=(pl.BlockSpec((None, tile_r, C_PAD), lambda b, t: (b, t, 0)),
                   pl.BlockSpec((None, 8, C_PAD), lambda b, t: (b, 0, 0))),
        scratch_shapes=[pltpu.VMEM((1, C_PAD), jnp.float32),
                        pltpu.VMEM((1, C_PAD), jnp.float32)],
        compiler_params=pltpu.CompilerParams(
            dimension_semantics=("parallel", "arbitrary"),
            vmem_limit_bytes=32 * 1024 * 1024),
    )(x_pack, pp["w1_block"], pp["b1_block"], pp["w2_block"], pp["b2_block"],
      pp["fold"], pp["proj_w1m"], pp["proj_w1v"], pp["proj_b1p"],
      pp["proj_w2p"], pp["proj_b2p"])

    qk = qk8[:, 0, :]
    q = qk[:B, :NUM_CLASSES]
    k = qk[B:, :NUM_CLASSES]

    # ---- patch means + proj1: both images and all patches in ONE launch ----------
    idx_arr = build_patch_index(np.asarray(index_np), h, w, H, W, patch_size)
    T = idx_arr.shape[0]
    T_pad = max(8, -(-T // 8) * 8)
    idx_flat = np.zeros((9 * T_pad,), np.int32)          # flat 1-D SMEM (no 2-D padding)
    idx_flat[:9 * T] = idx_arr.reshape(-1)

    # Packed feat -> (B2, h, w*C_ENC): pure row-major relabeling, element order unchanged.
    feat_rows = feat_packed.reshape(B2, h, w * C_ENC)

    # Constant lane-fold matrix: collapses (w positions x C channels) lanes per channel.
    gfold = np.zeros((w * C_ENC, C_PAD), np.float32)
    for j in range(w):
        for ch in range(C_ENC):
            gfold[j * C_ENC + ch, ch] = 1.0

    kern_b = functools.partial(_patch_proj1_kernel, n_valid=T, t_pad=T_pad,
                               feat_h=h, feat_w=w, n_img=B)
    qk1 = pl.pallas_call(
        kern_b,
        out_shape=jax.ShapeDtypeStruct((2 * T_pad, C_PAD), jnp.float32),
        in_specs=[_SMEM, _VMEM, _VMEM, _VMEM, _VMEM, _VMEM, _VMEM],
        out_specs=_VMEM,
    )(jnp.asarray(idx_flat), feat_rows, jnp.asarray(gfold),
      pp["proj1_w1p"], pp["proj1_b1p"], pp["proj1_w2p"], pp["proj1_b2p"])

    q1 = qk1[:T, :PATCH_OUT_CHANNEL]
    k1 = qk1[T_pad:T_pad + T, :PATCH_OUT_CHANNEL]
    return q, k, q1, k1


# ----------------------------------- main -------------------------------------
if __name__ == "__main__":
    key = jax.random.PRNGKey(0)
    kx, kx1, kidx, kp = jax.random.split(key, 4)

    B, H, W = 2, 32, 32
    inp = jax.random.normal(kx, (B, CIN, H, W), dtype=jnp.float32)
    inp1 = jax.random.normal(kx1, (B, CIN, H, W), dtype=jnp.float32)

    # index: (B, patch_num, 4) in input-image coordinates; entries with
    # index[i, j, 0] == 0 are skipped (as in the reference code).
    index_np = np.array(jax.random.randint(kidx, (B, PATCH_NUM, 4), 8, 25),
                        dtype=np.int32)
    index_np[0, 1, 0] = 0   # exercise the skip path

    params = prepare_params(init_params(kp))
    q, k, q1, k1 = deeplab_forward(params, inp, inp1, index_np)
    jax.block_until_ready((q, k, q1, k1))

    T = int(np.sum(index_np[:, :, 0] != 0))
    assert q.shape == (B, NUM_CLASSES) and k.shape == (B, NUM_CLASSES)
    assert q1.shape == (T, PATCH_OUT_CHANNEL) and k1.shape == q1.shape
    print("KERNEL_OK")
</pallas_src>

<mosaic_0001>
module attributes {stable_mosaic.version = 11 : i64} {
  func.func @_backbone_encoder_head_kernel(%arg0: i32, %arg1: i32, %arg2: memref<1x4x768xbf16, #tpu.memory_space<vmem>>, %arg3: memref<768x256xbf16, #tpu.memory_space<vmem>>, %arg4: memref<1x256xf32, #tpu.memory_space<vmem>>, %arg5: memref<256x128xbf16, #tpu.memory_space<vmem>>, %arg6: memref<1x128xf32, #tpu.memory_space<vmem>>, %arg7: memref<128x128xf32, #tpu.memory_space<vmem>>, %arg8: memref<128x128xf32, #tpu.memory_space<vmem>>, %arg9: memref<128x128xf32, #tpu.memory_space<vmem>>, %arg10: memref<1x128xf32, #tpu.memory_space<vmem>>, %arg11: memref<128x128xf32, #tpu.memory_space<vmem>>, %arg12: memref<1x128xf32, #tpu.memory_space<vmem>>, %arg13: memref<1x4x128xf32, #tpu.memory_space<vmem>>, %arg14: memref<1x8x128xf32, #tpu.memory_space<vmem>>, %arg15: memref<1x128xf32, #tpu.memory_space<vmem>>, %arg16: memref<1x128xf32, #tpu.memory_space<vmem>>) attributes {dimension_semantics = [#tpu.dimension_semantics<parallel>, #tpu.dimension_semantics<arbitrary>], iteration_bounds = array<i64: 4, 1>, scalar_prefetch = 0 : i64, scratch_operands = 2 : i64, tpu.core_type = #tpu.core_type<tc>, window_params = [{transform_indices = @transform_0, window_bounds = array<i64: 1, 4, 768>}, {pipeline_mode = #tpu.pipeline_mode<synchronous>, transform_indices = @transform_1, window_bounds = array<i64: 768, 256>}, {pipeline_mode = #tpu.pipeline_mode<synchronous>, transform_indices = @transform_2, window_bounds = array<i64: 1, 256>}, {pipeline_mode = #tpu.pipeline_mode<synchronous>, transform_indices = @transform_3, window_bounds = array<i64: 256, 128>}, {pipeline_mode = #tpu.pipeline_mode<synchronous>, transform_indices = @transform_4, window_bounds = array<i64: 1, 128>}, {pipeline_mode = #tpu.pipeline_mode<synchronous>, transform_indices = @transform_5, window_bounds = array<i64: 128, 128>}, {pipeline_mode = #tpu.pipeline_mode<synchronous>, transform_indices = @transform_6, window_bounds = array<i64: 128, 128>}, {pipeline_mode = #tpu.pipeline_mode<synchronous>, transform_indices = @transform_7, window_bounds = array<i64: 128, 128>}, {pipeline_mode = #tpu.pipeline_mode<synchronous>, transform_indices = @transform_8, window_bounds = array<i64: 1, 128>}, {pipeline_mode = #tpu.pipeline_mode<synchronous>, transform_indices = @transform_9, window_bounds = array<i64: 128, 128>}, {pipeline_mode = #tpu.pipeline_mode<synchronous>, transform_indices = @transform_10, window_bounds = array<i64: 1, 128>}, {transform_indices = @transform_11, window_bounds = array<i64: 1, 4, 128>}, {transform_indices = @transform_12, window_bounds = array<i64: 1, 8, 128>}]} {
    %c0 = arith.constant 0 : index
    %c0_0 = arith.constant 0 : index
    %c0_1 = arith.constant 0 : index
    %0 = vector.load %arg2[%c0, %c0_0, %c0_1] : memref<1x4x768xbf16, #tpu.memory_space<vmem>>, vector<1x4x768xbf16>
    %1 = vector.shape_cast %0 : vector<1x4x768xbf16> to vector<4x768xbf16>
    %c0_2 = arith.constant 0 : index
    %c0_3 = arith.constant 0 : index
    %2 = vector.load %arg3[%c0_2, %c0_3] : memref<768x256xbf16, #tpu.memory_space<vmem>>, vector<768x256xbf16>
    %cst = arith.constant dense<0.000000e+00> : vector<4x256xf32>
    %3 = tpu.matmul %1, %2, %cst {dimension_numbers = #tpu.dot_dimension_numbers<[1], [0], [0], [1], [0, 0, 1, 1], [], []>} : vector<4x768xbf16>, vector<768x256xbf16>, vector<4x256xf32> -> vector<4x256xf32>
    %c0_4 = arith.constant 0 : index
    %c0_5 = arith.constant 0 : index
    %4 = vector.load %arg4[%c0_4, %c0_5] : memref<1x256xf32, #tpu.memory_space<vmem>>, vector<1x256xf32>
    %5 = vector.broadcast %4 : vector<1x256xf32> to vector<4x256xf32>
    %6 = arith.addf %3, %5 : vector<4x256xf32>
    %cst_6 = arith.constant 0.000000e+00 : f32
    %7 = vector.broadcast %cst_6 : f32 to vector<4x256xf32>
    %8 = arith.maximumf %6, %7 : vector<4x256xf32>
    %9 = arith.truncf %8 : vector<4x256xf32> to vector<4x256xbf16>
    %c0_7 = arith.constant 0 : index
    %c0_8 = arith.constant 0 : index
    %10 = vector.load %arg5[%c0_7, %c0_8] : memref<256x128xbf16, #tpu.memory_space<vmem>>, vector<256x128xbf16>
    %cst_9 = arith.constant dense<0.000000e+00> : vector<4x128xf32>
    %11 = tpu.matmul %9, %10, %cst_9 {dimension_numbers = #tpu.dot_dimension_numbers<[1], [0], [0], [1], [0, 0, 1, 1], [], []>} : vector<4x256xbf16>, vector<256x128xbf16>, vector<4x128xf32> -> vector<4x128xf32>
    %c0_10 = arith.constant 0 : index
    %c0_11 = arith.constant 0 : index
    %12 = vector.load %arg6[%c0_10, %c0_11] : memref<1x128xf32, #tpu.memory_space<vmem>>, vector<1x128xf32>
    %13 = vector.broadcast %12 : vector<1x128xf32> to vector<4x128xf32>
    %14 = arith.addf %11, %13 : vector<4x128xf32>
    %cst_12 = arith.constant 0.000000e+00 : f32
    %15 = vector.broadcast %cst_12 : f32 to vector<4x128xf32>
    %16 = arith.maximumf %14, %15 : vector<4x128xf32>
    %c0_13 = arith.constant 0 : index
    %c0_14 = arith.constant 0 : index
    %c0_15 = arith.constant 0 : index
    %17 = vector.load %arg13[%c0_13, %c0_14, %c0_15] : memref<1x4x128xf32, #tpu.memory_space<vmem>>, vector<1x4x128xf32>
    %18 = vector.shape_cast %17 : vector<1x4x128xf32> to vector<4x128xf32>
    %19 = vector.shape_cast %16 : vector<4x128xf32> to vector<1x4x128xf32>
    tpu.vector_store %arg13[%c0_13, %c0_14, %c0_15], %19 {strides = array<i32>} : memref<1x4x128xf32, #tpu.memory_space<vmem>>, vector<1x4x128xf32>,
    %c0_i32 = arith.constant 0 : i32
    %20 = arith.cmpi eq, %arg1, %c0_i32 : i32
    %21 = arith.extui %20 : i1 to i32
    %c0_i32_16 = arith.constant 0 : i32
    %22 = arith.cmpi ne, %21, %c0_i32_16 : i32
    scf.if %22 {
      %cst_29 = arith.constant 0.000000e+00 : f32
      %37 = vector.broadcast %cst_29 : f32 to vector<1x128xf32>
      %c0_30 = arith.constant 0 : index
      %c0_31 = arith.constant 0 : index
      %38 = vector.load %arg15[%c0_30, %c0_31] : memref<1x128xf32, #tpu.memory_space<vmem>>, vector<1x128xf32>
      tpu.vector_store %arg15[%c0_30, %c0_31], %37 {strides = array<i32>} : memref<1x128xf32, #tpu.memory_space<vmem>>, vector<1x128xf32>,
      %cst_32 = arith.constant 0.000000e+00 : f32
      %39 = vector.broadcast %cst_32 : f32 to vector<1x128xf32>
      %c0_33 = arith.constant 0 : index
      %c0_34 = arith.constant 0 : index
      %40 = vector.load %arg16[%c0_33, %c0_34] : memref<1x128xf32, #tpu.memory_space<vmem>>, vector<1x128xf32>
      tpu.vector_store %arg16[%c0_33, %c0_34], %39 {strides = array<i32>} : memref<1x128xf32, #tpu.memory_space<vmem>>, vector<1x128xf32>,
    } else {
    }
    %c0_17 = arith.constant 0 : index
    %c0_18 = arith.constant 0 : index
    %23 = vector.load %arg15[%c0_17, %c0_18] : memref<1x128xf32, #tpu.memory_space<vmem>>, vector<1x128xf32>
    %cst_19 = arith.constant dense<0.000000e+00> : vector<128xf32>
    %24 = vector.multi_reduction <add>, %16, %cst_19 [0] : vector<4x128xf32> to vector<128xf32>
    %25 = vector.shape_cast %24 : vector<128xf32> to vector<1x128xf32>
    %26 = arith.addf %23, %25 : vector<1x128xf32>
    %c0_20 = arith.constant 0 : index
    %c0_21 = arith.constant 0 : index
    %27 = vector.load %arg15[%c0_20, %c0_21] : memref<1x128xf32, #tpu.memory_space<vmem>>, vector<1x128xf32>
    tpu.vector_store %arg15[%c0_20, %c0_21], %26 {strides = array<i32>} : memref<1x128xf32, #tpu.memory_space<vmem>>, vector<1x128xf32>,
    %c0_22 = arith.constant 0 : index
    %c0_23 = arith.constant 0 : index
    %28 = vector.load %arg16[%c0_22, %c0_23] : memref<1x128xf32, #tpu.memory_space<vmem>>, vector<1x128xf32>
    %29 = arith.mulf %16, %16 : vector<4x128xf32>
    %cst_24 = arith.constant dense<0.000000e+00> : vector<128xf32>
    %30 = vector.multi_reduction <add>, %29, %cst_24 [0] : vector<4x128xf32> to vector<128xf32>
    %31 = vector.shape_cast %30 : vector<128xf32> to vector<1x128xf32>
    %32 = arith.addf %28, %31 : vector<1x128xf32>
    %c0_25 = arith.constant 0 : index
    %c0_26 = arith.constant 0 : index
    %33 = vector.load %arg16[%c0_25, %c0_26] : memref<1x128xf32, #tpu.memory_space<vmem>>, vector<1x128xf32>
    tpu.vector_store %arg16[%c0_25, %c0_26], %32 {strides = array<i32>} : memref<1x128xf32, #tpu.memory_space<vmem>>, vector<1x128xf32>,
    %c0_i32_27 = arith.constant 0 : i32
    %34 = arith.cmpi eq, %arg1, %c0_i32_27 : i32
    %35 = arith.extui %34 : i1 to i32
    %c0_i32_28 = arith.constant 0 : i32
    %36 = arith.cmpi ne, %35, %c0_i32_28 : i32
    scf.if %36 {
      %c0_29 = arith.constant 0 : index
      %c0_30 = arith.constant 0 : index
      %37 = vector.load %arg15[%c0_29, %c0_30] : memref<1x128xf32, #tpu.memory_space<vmem>>, vector<1x128xf32>
      %c0_31 = arith.constant 0 : index
      %c0_32 = arith.constant 0 : index
      %38 = vector.load %arg7[%c0_31, %c0_32] : memref<128x128xf32, #tpu.memory_space<vmem>>, vector<128x128xf32>
      %cst_33 = arith.constant dense<0.000000e+00> : vector<1x128xf32>
      %39 = tpu.matmul %37, %38, %cst_33 {dimension_numbers = #tpu.dot_dimension_numbers<[1], [0], [0], [1], [0, 0, 1, 1], [], []>} : vector<1x128xf32>, vector<128x128xf32>, vector<1x128xf32> -> vector<1x128xf32>
      %c0_34 = arith.constant 0 : index
      %c0_35 = arith.constant 0 : index
      %40 = vector.load %arg16[%c0_34, %c0_35] : memref<1x128xf32, #tpu.memory_space<vmem>>, vector<1x128xf32>
      %c0_36 = arith.constant 0 : index
      %c0_37 = arith.constant 0 : index
      %41 = vector.load %arg7[%c0_36, %c0_37] : memref<128x128xf32, #tpu.memory_space<vmem>>, vector<128x128xf32>
      %cst_38 = arith.constant dense<0.000000e+00> : vector<1x128xf32>
      %42 = tpu.matmul %40, %41, %cst_38 {dimension_numbers = #tpu.dot_dimension_numbers<[1], [0], [0], [1], [0, 0, 1, 1], [], []>} : vector<1x128xf32>, vector<128x128xf32>, vector<1x128xf32> -> vector<1x128xf32>
      %cst_39 = arith.constant 1.562500e-02 : f32
      %43 = vector.broadcast %cst_39 : f32 to vector<1x128xf32>
      %44 = arith.mulf %39, %43 : vector<1x128xf32>
      %45 = arith.mulf %39, %44 : vector<1x128xf32>
      %46 = arith.subf %42, %45 : vector<1x128xf32>
      %cst_40 = arith.constant 0.0158730168 : f32
      %47 = vector.broadcast %cst_40 : f32 to vector<1x128xf32>
      %48 = arith.mulf %46, %47 : vector<1x128xf32>
      %c0_41 = arith.constant 0 : index
      %c0_42 = arith.constant 0 : index
      %49 = vector.load %arg8[%c0_41, %c0_42] : memref<128x128xf32, #tpu.memory_space<vmem>>, vector<128x128xf32>
      %cst_43 = arith.constant dense<0.000000e+00> : vector<1x128xf32>
      %50 = tpu.matmul %44, %49, %cst_43 {dimension_numbers = #tpu.dot_dimension_numbers<[1], [0], [0], [1], [0, 0, 1, 1], [], []>} : vector<1x128xf32>, vector<128x128xf32>, vector<1x128xf32> -> vector<1x128xf32>
      %c0_44 = arith.constant 0 : index
      %c0_45 = arith.constant 0 : index
      %51 = vector.load %arg9[%c0_44, %c0_45] : memref<128x128xf32, #tpu.memory_space<vmem>>, vector<128x128xf32>
      %cst_46 = arith.constant dense<0.000000e+00> : vector<1x128xf32>
      %52 = tpu.matmul %48, %51, %cst_46 {dimension_numbers = #tpu.dot_dimension_numbers<[1], [0], [0], [1], [0, 0, 1, 1], [], []>} : vector<1x128xf32>, vector<128x128xf32>, vector<1x128xf32> -> vector<1x128xf32>
      %53 = arith.addf %50, %52 : vector<1x128xf32>
      %c0_47 = arith.constant 0 : index
      %c0_48 = arith.constant 0 : index
      %54 = vector.load %arg10[%c0_47, %c0_48] : memref<1x128xf32, #tpu.memory_space<vmem>>, vector<1x128xf32>
      %55 = arith.addf %53, %54 : vector<1x128xf32>
      %cst_49 = arith.constant 0.000000e+00 : f32
      %56 = vector.broadcast %cst_49 : f32 to vector<1x128xf32>
      %57 = arith.maximumf %55, %56 : vector<1x128xf32>
      %c0_50 = arith.constant 0 : index
      %c0_51 = arith.constant 0 : index
      %58 = vector.load %arg11[%c0_50, %c0_51] : memref<128x128xf32, #tpu.memory_space<vmem>>, vector<128x128xf32>
      %cst_52 = arith.constant dense<0.000000e+00> : vector<1x128xf32>
      %59 = tpu.matmul %57, %58, %cst_52 {dimension_numbers = #tpu.dot_dimension_numbers<[1], [0], [0], [1], [0, 0, 1, 1], [], []>} : vector<1x128xf32>, vector<128x128xf32>, vector<1x128xf32> -> vector<1x128xf32>
      %c0_53 = arith.constant 0 : index
      %c0_54 = arith.constant 0 : index
      %60 = vector.load %arg12[%c0_53, %c0_54] : memref<1x128xf32, #tpu.memory_space<vmem>>, vector<1x128xf32>
      %61 = arith.addf %59, %60 : vector<1x128xf32>
      %62 = vector.shape_cast %61 : vector<1x128xf32> to vector<1x128xf32>
      %63 = vector.broadcast %62 : vector<1x128xf32> to vector<8x128xf32>
      %c0_55 = arith.constant 0 : index
      %c0_56 = arith.constant 0 : index
      %c0_57 = arith.constant 0 : index
      %64 = vector.load %arg14[%c0_55, %c0_56, %c0_57] : memref<1x8x128xf32, #tpu.memory_space<vmem>>, vector<1x8x128xf32>
      %65 = vector.shape_cast %64 : vector<1x8x128xf32> to vector<8x128xf32>
      %66 = vector.shape_cast %63 : vector<8x128xf32> to vector<1x8x128xf32>
      tpu.vector_store %arg14[%c0_55, %c0_56, %c0_57], %66 {strides = array<i32>} : memref<1x8x128xf32, #tpu.memory_space<vmem>>, vector<1x8x128xf32>,
    } else {
    }
    return
  }
  func.func @transform_0(%arg0: i32, %arg1: i32) -> (i32, i32, i32) {
    %c0_i32 = arith.constant 0 : i32
    %c0_i32_0 = arith.constant 0 : i32
    return %arg0, %arg1, %c0_i32 : i32, i32, i32
  }
  func.func @transform_1(%arg0: i32, %arg1: i32) -> (i32, i32) {
    %c0_i32 = arith.constant 0 : i32
    %c0_i32_0 = arith.constant 0 : i32
    %c0_i32_1 = arith.constant 0 : i32
    return %c0_i32, %c0_i32_0 : i32, i32
  }
  func.func @transform_2(%arg0: i32, %arg1: i32) -> (i32, i32) {
    %c0_i32 = arith.constant 0 : i32
    %c0_i32_0 = arith.constant 0 : i32
    %c0_i32_1 = arith.constant 0 : i32
    return %c0_i32, %c0_i32_0 : i32, i32
  }
  func.func @transform_3(%arg0: i32, %arg1: i32) -> (i32, i32) {
    %c0_i32 = arith.constant 0 : i32
    %c0_i32_0 = arith.constant 0 : i32
    %c0_i32_1 = arith.constant 0 : i32
    return %c0_i32, %c0_i32_0 : i32, i32
  }
  func.func @transform_4(%arg0: i32, %arg1: i32) -> (i32, i32) {
    %c0_i32 = arith.constant 0 : i32
    %c0_i32_0 = arith.constant 0 : i32
    %c0_i32_1 = arith.constant 0 : i32
    return %c0_i32, %c0_i32_0 : i32, i32
  }
  func.func @transform_5(%arg0: i32, %arg1: i32) -> (i32, i32) {
    %c0_i32 = arith.constant 0 : i32
    %c0_i32_0 = arith.constant 0 : i32
    %c0_i32_1 = arith.constant 0 : i32
    return %c0_i32, %c0_i32_0 : i32, i32
  }
  func.func @transform_6(%arg0: i32, %arg1: i32) -> (i32, i32) {
    %c0_i32 = arith.constant 0 : i32
    %c0_i32_0 = arith.constant 0 : i32
    %c0_i32_1 = arith.constant 0 : i32
    return %c0_i32, %c0_i32_0 : i32, i32
  }
  func.func @transform_7(%arg0: i32, %arg1: i32) -> (i32, i32) {
    %c0_i32 = arith.constant 0 : i32
    %c0_i32_0 = arith.constant 0 : i32
    %c0_i32_1 = arith.constant 0 : i32
    return %c0_i32, %c0_i32_0 : i32, i32
  }
  func.func @transform_8(%arg0: i32, %arg1: i32) -> (i32, i32) {
    %c0_i32 = arith.constant 0 : i32
    %c0_i32_0 = arith.constant 0 : i32
    %c0_i32_1 = arith.constant 0 : i32
    return %c0_i32, %c0_i32_0 : i32, i32
  }
  func.func @transform_9(%arg0: i32, %arg1: i32) -> (i32, i32) {
    %c0_i32 = arith.constant 0 : i32
    %c0_i32_0 = arith.constant 0 : i32
    %c0_i32_1 = arith.constant 0 : i32
    return %c0_i32, %c0_i32_0 : i32, i32
  }
  func.func @transform_10(%arg0: i32, %arg1: i32) -> (i32, i32) {
    %c0_i32 = arith.constant 0 : i32
    %c0_i32_0 = arith.constant 0 : i32
    %c0_i32_1 = arith.constant 0 : i32
    return %c0_i32, %c0_i32_0 : i32, i32
  }
  func.func @transform_11(%arg0: i32, %arg1: i32) -> (i32, i32, i32) {
    %c0_i32 = arith.constant 0 : i32
    %c0_i32_0 = arith.constant 0 : i32
    return %arg0, %arg1, %c0_i32 : i32, i32, i32
  }
  func.func @transform_12(%arg0: i32, %arg1: i32) -> (i32, i32, i32) {
    %c0_i32 = arith.constant 0 : i32
    %c0_i32_0 = arith.constant 0 : i32
    %c0_i32_1 = arith.constant 0 : i32
    return %arg0, %c0_i32, %c0_i32_0 : i32, i32, i32
  }
}

</mosaic_0001>

<llo_original>
// kernel: tpu_custom_call.1
$region0: #{tpu_custom_call.1}
  #allocation0 [shape = 'u32[]', space=smem, size = 0x4, offset = 0x4, fixed_abs, tag = 'smem constant byte address 0x4 - core index']
  #allocation1 [shape = 'u32[144,128]{1,0:T(1,128)}', space=vmem, size = 0x12000, scoped, tag = 'internal scratch']
  #allocation2 [shape = 'f32[1,128]{1,0:T(1,128)}', space=vmem, size = 0x200, scoped, tag = 'scratch operand']
  #allocation3 [shape = 'f32[1,128]{1,0:T(1,128)}', space=vmem, size = 0x200, scoped, tag = 'scratch operand']
  %s0 = inlined_call_operand.hbm [shape: bf16[4,4,768], index: 0, kind: input, shape index: {}]
  %s1 = inlined_call_operand.hbm [shape: bf16[768,256], index: 1, kind: input, shape index: {}]
  %s2 = inlined_call_operand.vmem [shape: f32[1,256], index: 2, kind: input, shape index: {}]
  %s3 = inlined_call_operand.hbm [shape: bf16[256,128], index: 3, kind: input, shape index: {}]
  %s4 = inlined_call_operand.vmem [shape: f32[1,128], index: 4, kind: input, shape index: {}]
  %s5 = inlined_call_operand.hbm [shape: f32[128,128], index: 5, kind: input, shape index: {}]
  %s6 = inlined_call_operand.hbm [shape: f32[128,128], index: 6, kind: input, shape index: {}]
  %s7 = inlined_call_operand.hbm [shape: f32[128,128], index: 7, kind: input, shape index: {}]
  %s8 = inlined_call_operand.vmem [shape: f32[1,128], index: 8, kind: input, shape index: {}]
  %s9 = inlined_call_operand.hbm [shape: f32[128,128], index: 9, kind: input, shape index: {}]
  %s10 = inlined_call_operand.vmem [shape: f32[1,128], index: 10, kind: input, shape index: {}]
  %s11 = inlined_call_operand.hbm [shape: f32[4,4,128], index: 11, kind: output, shape index: {0}]
  %s12 = inlined_call_operand.hbm [shape: f32[4,8,128], index: 12, kind: output, shape index: {1}]
  %13 = xla_tuple %s11, %s12
  %s14 = sld [smem:[#allocation0]]
  $region121: #{tpu_custom_call.1} parent=0
    _
  %s16 = ssub.s32 1, %s14
  %s17 = scalar_select 0, %s16, %s14
  $region1: #{tpu_custom_call.1} parent=0
    #allocation4 [shape = 'u8[12288]{0}', space=vmem, size = 0x3000, scoped, tag = 'input window, operand 0']
    #allocation5 [shape = 's32[2]{0}', space=sflag, size = 0x8, scoped, tag = 'scoped memory for tpu_custom_call.1']
    #allocation6 [shape = 's32[2]{0}', space=sflag, size = 0x8, scoped, tag = 'scoped memory for tpu_custom_call.1']
    #allocation7 [shape = 'u8[393216]{0}', space=vmem, size = 0x60000, scoped, tag = 'input window, operand 1, single buffered']
    #allocation8 [shape = 's32[1]{0}', space=sflag, size = 0x4, scoped, tag = 'scoped memory for tpu_custom_call.1']
    #allocation9 [shape = 'u8[65536]{0}', space=vmem, size = 0x10000, scoped, tag = 'input window, operand 3, single buffered']
    #allocation10 [shape = 'u8[65536]{0}', space=vmem, size = 0x10000, scoped, tag = 'input window, operand 5, single buffered']
    #allocation11 [shape = 's32[1]{0}', space=sflag, size = 0x4, scoped, tag = 'scoped memory for tpu_custom_call.1']
    #allocation12 [shape = 'u8[65536]{0}', space=vmem, size = 0x10000, scoped, tag = 'input window, operand 6, single buffered']
    #allocation13 [shape = 'u8[65536]{0}', space=vmem, size = 0x10000, scoped, tag = 'input window, operand 7, single buffered']
    #allocation14 [shape = 's32[1]{0}', space=sflag, size = 0x4, scoped, tag = 'scoped memory for tpu_custom_call.1']
    #allocation15 [shape = 'u8[65536]{0}', space=vmem, size = 0x10000, scoped, tag = 'input window, operand 9, single buffered']
    #allocation16 [shape = 'u8[4096]{0}', space=vmem, size = 0x1000, scoped, tag = 'output window, operand 0']
    #allocation17 [shape = 'u8[8192]{0}', space=vmem, size = 0x2000, scoped, tag = 'output window, operand 1']
    #allocation18 [shape = 's32[2]{0}', space=sflag, size = 0x8, scoped, tag = 'scoped memory for tpu_custom_call.1']
    %18 = vsyncpa [#allocation5], 0
    %s19 = scalar_lea.sflag [#allocation5], 1
    %20 = vsyncpa %s19, 0
    %21 = vsyncpa [#allocation8], 0
    %22 = vsyncpa [#allocation11], 0
    %23 = vsyncpa [#allocation14], 0
    %24 = vsyncpa [#allocation6], 0
    %s25 = scalar_lea.sflag [#allocation6], 1
    %26 = vsyncpa %s25, 0
    %27 = vsyncpa [#allocation18], 0
    %s28 = scalar_lea.sflag [#allocation18], 1
    %29 = vsyncpa %s28, 0
    loop: start=0, step=1, limit=6
    $region2: #{tpu_custom_call.1} parent=1 // loop_pre_header
      _
    $region3: #{tpu_custom_call.1} parent=1 // loop_header
      %s31 = sphi 0, %s35
      %p32 = scmp.ge.s32.totalorder %s31, 6
      %s38 = sphi 0, %s50
      %s39 = sphi 0, %s46
      %s40 = sphi 0, %s38
      %s41 = sphi 0, %s39
      %s42 = sphi 0, %s40
      %s43 = sphi 0, %s41
      %s55 = sphi 0, %s57
      %s58 = sphi 0, %s55
      %s59 = sphi 0, %s58
      %s75 = sphi 0, %s59
      %s79 = sphi 0, %s79
      %s81 = sphi 0, %s79
      %s82 = sphi 0, %s81
      %s96 = sphi 0, %s82
      %s100 = sphi 0, %s100
      %s102 = sphi 0, %s100
      %s103 = sphi 0, %s102
      %s117 = sphi 0, %s103
      %s121 = sphi 0, %s121
      %s123 = sphi 0, %s121
      %s124 = sphi 0, %s123
      %s138 = sphi 0, %s124
      %s142 = sphi 0, %s142
      %s144 = sphi 0, %s142
      %s145 = sphi 0, %s144
      %s159 = sphi 0, %s145
      %s163 = sphi 0, %s163
      %s165 = sphi 0, %s163
      %s166 = sphi 0, %s165
      %s180 = sphi 0, %s166
      %s184 = sphi 0, %s184
      %s186 = sphi 0, %s184
      %s187 = sphi 0, %s186
      %s201 = sphi 0, %s187
      %s205 = sphi 0, %s205
      %s207 = sphi 0, %s205
      %s208 = sphi 0, %s207
      %s222 = sphi 0, %s208
      %s226 = sphi 0, %s226
      %s228 = sphi 0, %s226
      %s229 = sphi 0, %s228
      %s243 = sphi 0, %s229
      %s247 = sphi 0, %s247
      %s249 = sphi 0, %s247
      %s250 = sphi 0, %s249
      %s264 = sphi 0, %s250
      %s268 = sphi 0, %s268
      %s270 = sphi 0, %s268
      %s271 = sphi 0, %s270
      %s285 = sphi 0, %s271
      %s293 = sphi 0, %s295
      %s296 = sphi 0, %s293
      %s297 = sphi 0, %s296
      %s313 = sphi 0, %s297
      %s319 = sphi 0, %s321
      %s322 = sphi 0, %s319
      %s323 = sphi 0, %s322
      %s339 = sphi 0, %s323
    $region4: #{tpu_custom_call.1} parent=1 // loop_header_branch
      %34 = sbr.rel (%p32) target = $region8
    $region5: #{tpu_custom_call.1} parent=1 // loop_body
      %s36 = ssub.s32 %s31, 1
      %s37 = ssub.s32 %s31, 2
      %s44 = sadd.s32 1, %s39
      %p45 = scmp.ge.s32.totalorder %s44, 1
      %s46 = scalar_select %p45, 0, %s44
      %s47 = sadd.s32 1, %s38
      %s48 = scalar_select %p45, %s47, %s38
      %p49 = scmp.ge.s32.totalorder %s48, 4
      %s50 = scalar_select %p49, 0, %s48
      %s51 = ssub.s32 %s38, %s50
      %s52 = ssub.s32 %s39, %s46
      %s53 = sor.u32 %s51, %s52
      %p54 = scmp.eq.s32.totalorder %s53, 0
      %s56 = sadd.s32 %s55, 1
      %s57 = scalar_select %p54, %s55, %s56
      %p60 = pneg %p54
      %p61 = scmp.eq.s32.totalorder %s31, 3
      %p62 = por %p60, %p61
      %p63 = scmp.ne.s32.totalorder %s55, %s58
      %p64 = scmp.eq.s32.totalorder %s31, 0
      %p65 = por %p63, %p64
      %p66 = scmp.ne.s32.totalorder %s55, %s58
      %p67 = scmp.eq.s32.totalorder %s36, 3
      %p68 = por %p66, %p67
      %p69 = scmp.ne.s32.totalorder %s58, %s59
      %p70 = scmp.eq.s32.totalorder %s36, 0
      %p71 = por %p69, %p70
      %p72 = scmp.ne.s32.totalorder %s58, %s59
      %p73 = scmp.eq.s32.totalorder %s37, 3
      %p74 = por %p72, %p73
      %p76 = scmp.ne.s32.totalorder %s59, %s75
      %p77 = scmp.eq.s32.totalorder %s37, 0
      %p78 = por %p76, %p77
      %s80 = sadd.s32 %s79, 1
      %p83 = scmp.eq.s32.totalorder %s31, 3
      %p84 = scmp.ne.s32.totalorder %s79, %s81
      %p85 = scmp.eq.s32.totalorder %s31, 0
      %p86 = por %p84, %p85
      %p87 = scmp.ne.s32.totalorder %s79, %s81
      %p88 = scmp.eq.s32.totalorder %s36, 3
      %p89 = por %p87, %p88
      %p90 = scmp.ne.s32.totalorder %s81, %s82
      %p91 = scmp.eq.s32.totalorder %s36, 0
      %p92 = por %p90, %p91
      %p93 = scmp.ne.s32.totalorder %s81, %s82
      %p94 = scmp.eq.s32.totalorder %s37, 3
      %p95 = por %p93, %p94
      %p97 = scmp.ne.s32.totalorder %s82, %s96
      %p98 = scmp.eq.s32.totalorder %s37, 0
      %p99 = por %p97, %p98
      %s101 = sadd.s32 %s100, 1
      %p104 = scmp.eq.s32.totalorder %s31, 3
      %p105 = scmp.ne.s32.totalorder %s100, %s102
      %p106 = scmp.eq.s32.totalorder %s31, 0
      %p107 = por %p105, %p106
      %p108 = scmp.ne.s32.totalorder %s100, %s102
      %p109 = scmp.eq.s32.totalorder %s36, 3
      %p110 = por %p108, %p109
      %p111 = scmp.ne.s32.totalorder %s102, %s103
      %p112 = scmp.eq.s32.totalorder %s36, 0
      %p113 = por %p111, %p112
      %p114 = scmp.ne.s32.totalorder %s102, %s103
      %p115 = scmp.eq.s32.totalorder %s37, 3
      %p116 = por %p114, %p115
      %p118 = scmp.ne.s32.totalorder %s103, %s117
      %p119 = scmp.eq.s32.totalorder %s37, 0
      %p120 = por %p118, %p119
      %s122 = sadd.s32 %s121, 1
      %p125 = scmp.eq.s32.totalorder %s31, 3
      %p126 = scmp.ne.s32.totalorder %s121, %s123
      %p127 = scmp.eq.s32.totalorder %s31, 0
      %p128 = por %p126, %p127
      %p129 = scmp.ne.s32.totalorder %s121, %s123
      %p130 = scmp.eq.s32.totalorder %s36, 3
      %p131 = por %p129, %p130
      %p132 = scmp.ne.s32.totalorder %s123, %s124
      %p133 = scmp.eq.s32.totalorder %s36, 0
      %p134 = por %p132, %p133
      %p135 = scmp.ne.s32.totalorder %s123, %s124
      %p136 = scmp.eq.s32.totalorder %s37, 3
      %p137 = por %p135, %p136
      %p139 = scmp.ne.s32.totalorder %s124, %s138
      %p140 = scmp.eq.s32.totalorder %s37, 0
      %p141 = por %p139, %p140
      %s143 = sadd.s32 %s142, 1
      %p146 = scmp.eq.s32.totalorder %s31, 3
      %p147 = scmp.ne.s32.totalorder %s142, %s144
      %p148 = scmp.eq.s32.totalorder %s31, 0
      %p149 = por %p147, %p148
      %p150 = scmp.ne.s32.totalorder %s142, %s144
      %p151 = scmp.eq.s32.totalorder %s36, 3
      %p152 = por %p150, %p151
      %p153 = scmp.ne.s32.totalorder %s144, %s145
      %p154 = scmp.eq.s32.totalorder %s36, 0
      %p155 = por %p153, %p154
      %p156 = scmp.ne.s32.totalorder %s144, %s145
      %p157 = scmp.eq.s32.totalorder %s37, 3
      %p158 = por %p156, %p157
      %p160 = scmp.ne.s32.totalorder %s145, %s159
      %p161 = scmp.eq.s32.totalorder %s37, 0
      %p162 = por %p160, %p161
      %s164 = sadd.s32 %s163, 1
      %p167 = scmp.eq.s32.totalorder %s31, 3
      %p168 = scmp.ne.s32.totalorder %s163, %s165
      %p169 = scmp.eq.s32.totalorder %s31, 0
      %p170 = por %p168, %p169
      %p171 = scmp.ne.s32.totalorder %s163, %s165
      %p172 = scmp.eq.s32.totalorder %s36, 3
      %p173 = por %p171, %p172
      %p174 = scmp.ne.s32.totalorder %s165, %s166
      %p175 = scmp.eq.s32.totalorder %s36, 0
      %p176 = por %p174, %p175
      %p177 = scmp.ne.s32.totalorder %s165, %s166
      %p178 = scmp.eq.s32.totalorder %s37, 3
      %p179 = por %p177, %p178
      %p181 = scmp.ne.s32.totalorder %s166, %s180
      %p182 = scmp.eq.s32.totalorder %s37, 0
      %p183 = por %p181, %p182
      %s185 = sadd.s32 %s184, 1
      %p188 = scmp.eq.s32.totalorder %s31, 3
      %p189 = scmp.ne.s32.totalorder %s184, %s186
      %p190 = scmp.eq.s32.totalorder %s31, 0
      %p191 = por %p189, %p190
      %p192 = scmp.ne.s32.totalorder %s184, %s186
      %p193 = scmp.eq.s32.totalorder %s36, 3
      %p194 = por %p192, %p193
      %p195 = scmp.ne.s32.totalorder %s186, %s187
      %p196 = scmp.eq.s32.totalorder %s36, 0
      %p197 = por %p195, %p196
      %p198 = scmp.ne.s32.totalorder %s186, %s187
      %p199 = scmp.eq.s32.totalorder %s37, 3
      %p200 = por %p198, %p199
      %p202 = scmp.ne.s32.totalorder %s187, %s201
      %p203 = scmp.eq.s32.totalorder %s37, 0
      %p204 = por %p202, %p203
      %s206 = sadd.s32 %s205, 1
      %p209 = scmp.eq.s32.totalorder %s31, 3
      %p210 = scmp.ne.s32.totalorder %s205, %s207
      %p211 = scmp.eq.s32.totalorder %s31, 0
      %p212 = por %p210, %p211
      %p213 = scmp.ne.s32.totalorder %s205, %s207
      %p214 = scmp.eq.s32.totalorder %s36, 3
      %p215 = por %p213, %p214
      %p216 = scmp.ne.s32.totalorder %s207, %s208
      %p217 = scmp.eq.s32.totalorder %s36, 0
      %p218 = por %p216, %p217
      %p219 = scmp.ne.s32.totalorder %s207, %s208
      %p220 = scmp.eq.s32.totalorder %s37, 3
      %p221 = por %p219, %p220
      %p223 = scmp.ne.s32.totalorder %s208, %s222
      %p224 = scmp.eq.s32.totalorder %s37, 0
      %p225 = por %p223, %p224
      %s227 = sadd.s32 %s226, 1
      %p230 = scmp.eq.s32.totalorder %s31, 3
      %p231 = scmp.ne.s32.totalorder %s226, %s228
      %p232 = scmp.eq.s32.totalorder %s31, 0
      %p233 = por %p231, %p232
      %p234 = scmp.ne.s32.totalorder %s226, %s228
      %p235 = scmp.eq.s32.totalorder %s36, 3
      %p236 = por %p234, %p235
      %p237 = scmp.ne.s32.totalorder %s228, %s229
      %p238 = scmp.eq.s32.totalorder %s36, 0
      %p239 = por %p237, %p238
      %p240 = scmp.ne.s32.totalorder %s228, %s229
      %p241 = scmp.eq.s32.totalorder %s37, 3
      %p242 = por %p240, %p241
      %p244 = scmp.ne.s32.totalorder %s229, %s243
      %p245 = scmp.eq.s32.totalorder %s37, 0
      %p246 = por %p244, %p245
      %s248 = sadd.s32 %s247, 1
      %p251 = scmp.eq.s32.totalorder %s31, 3
      %p252 = scmp.ne.s32.totalorder %s247, %s249
      %p253 = scmp.eq.s32.totalorder %s31, 0
      %p254 = por %p252, %p253
      %p255 = scmp.ne.s32.totalorder %s247, %s249
      %p256 = scmp.eq.s32.totalorder %s36, 3
      %p257 = por %p255, %p256
      %p258 = scmp.ne.s32.totalorder %s249, %s250
      %p259 = scmp.eq.s32.totalorder %s36, 0
      %p260 = por %p258, %p259
      %p261 = scmp.ne.s32.totalorder %s249, %s250
      %p262 = scmp.eq.s32.totalorder %s37, 3
      %p263 = por %p261, %p262
      %p265 = scmp.ne.s32.totalorder %s250, %s264
      %p266 = scmp.eq.s32.totalorder %s37, 0
      %p267 = por %p265, %p266
      %s269 = sadd.s32 %s268, 1
      %p272 = scmp.eq.s32.totalorder %s31, 3
      %p273 = scmp.ne.s32.totalorder %s268, %s270
      %p274 = scmp.eq.s32.totalorder %s31, 0
      %p275 = por %p273, %p274
      %p276 = scmp.ne.s32.totalorder %s268, %s270
      %p277 = scmp.eq.s32.totalorder %s36, 3
      %p278 = por %p276, %p277
      %p279 = scmp.ne.s32.totalorder %s270, %s271
      %p280 = scmp.eq.s32.totalorder %s36, 0
      %p281 = por %p279, %p280
      %p282 = scmp.ne.s32.totalorder %s270, %s271
      %p283 = scmp.eq.s32.totalorder %s37, 3
      %p284 = por %p282, %p283
      %p286 = scmp.ne.s32.totalorder %s271, %s285
      %p287 = scmp.eq.s32.totalorder %s37, 0
      %p288 = por %p286, %p287
      %s289 = ssub.s32 %s38, %s50
      %s290 = ssub.s32 %s39, %s46
      %s291 = sor.u32 %s289, %s290
      %p292 = scmp.eq.s32.totalorder %s291, 0
      %s294 = sadd.s32 %s293, 1
      %s295 = scalar_select %p292, %s293, %s294
      %p298 = pneg %p292
      %p299 = scmp.eq.s32.totalorder %s31, 3
      %p300 = por %p298, %p299
      %p301 = scmp.ne.s32.totalorder %s293, %s296
      %p302 = scmp.eq.s32.totalorder %s31, 0
      %p303 = por %p301, %p302
      %p304 = scmp.ne.s32.totalorder %s293, %s296
      %p305 = scmp.eq.s32.totalorder %s36, 3
      %p306 = por %p304, %p305
      %p307 = scmp.ne.s32.totalorder %s296, %s297
      %p308 = scmp.eq.s32.totalorder %s36, 0
      %p309 = por %p307, %p308
      %p310 = scmp.ne.s32.totalorder %s296, %s297
      %p311 = scmp.eq.s32.totalorder %s37, 3
      %p312 = por %p310, %p311
      %p314 = scmp.ne.s32.totalorder %s297, %s313
      %p315 = scmp.eq.s32.totalorder %s37, 0
      %p316 = por %p314, %p315
      %s317 = ssub.s32 %s38, %s50
      %p318 = scmp.eq.s32.totalorder %s317, 0
      %s320 = sadd.s32 %s319, 1
      %s321 = scalar_select %p318, %s319, %s320
      %p324 = pneg %p318
      %p325 = scmp.eq.s32.totalorder %s31, 3
      %p326 = por %p324, %p325
      %p327 = scmp.ne.s32.totalorder %s319, %s322
      %p328 = scmp.eq.s32.totalorder %s31, 0
      %p329 = por %p327, %p328
      %p330 = scmp.ne.s32.totalorder %s319, %s322
      %p331 = scmp.eq.s32.totalorder %s36, 3
      %p332 = por %p330, %p331
      %p333 = scmp.ne.s32.totalorder %s322, %s323
      %p334 = scmp.eq.s32.totalorder %s36, 0
      %p335 = por %p333, %p334
      %p336 = scmp.ne.s32.totalorder %s322, %s323
      %p337 = scmp.eq.s32.totalorder %s37, 3
      %p338 = por %p336, %p337
      %p340 = scmp.ne.s32.totalorder %s323, %s339
      %p341 = scmp.eq.s32.totalorder %s37, 0
      %p342 = por %p340, %p341
      %p343 = scmp.le.s32.totalorder 1, %s31
      %p344 = scmp.lt.s32.totalorder %s31, 5
      %p345 = pnand %p343, %p344
      %p346 = pneg %p345
      // Predicated region
      $region9: #{tpu_custom_call.1} parent=5 // pred_check
        _
      $region10: #{tpu_custom_call.1} parent=5 // pred_check_branch
        %348 = sbr.rel (%p345) target = $region12
      $region11: #{tpu_custom_call.1} parent=5 // pred_region
        %s349 = ssub.s32 %s31, 1
        // Predicated region
        $region13: #{tpu_custom_call.1} parent=11 // pred_check
          %p350 = pneg %p92
        $region14: #{tpu_custom_call.1} parent=11 // pred_check_branch
          %352 = sbr.rel (%p350) target = $region16
        $region15: #{tpu_custom_call.1} parent=11 // pred_region
          %s354 = ssub.s32 12288, 12288
          %355 = vsyncadd [#allocation8], %s354
          %s356 = sshll.u32 [#allocation7], 4
          %s357 = int_to_ptr.vmem [resolvable:$true] %s356
          %362 = dma.hbm_to_vmem [thread:$0]  %s1, 12288, %s357, [#allocation8], 128, 128, 8
        $region16: #{tpu_custom_call.1} parent=11 // pred_fallthru
          _
        // Predicated region
        $region17: #{tpu_custom_call.1} parent=11 // pred_check
          %p363 = pneg %p113
        $region18: #{tpu_custom_call.1} parent=11 // pred_check_branch
          %365 = sbr.rel (%p363) target = $region20
        $region19: #{tpu_custom_call.1} parent=11 // pred_region
          _
        $region20: #{tpu_custom_call.1} parent=11 // pred_fallthru
          _
        // Predicated region
        $region21: #{tpu_custom_call.1} parent=11 // pred_check
          %p366 = pneg %p134
        $region22: #{tpu_custom_call.1} parent=11 // pred_check_branch
          %368 = sbr.rel (%p366) target = $region24
        $region23: #{tpu_custom_call.1} parent=11 // pred_region
          %s370 = ssub.s32 2048, 2048
          %371 = vsyncadd [#allocation8], %s370
          %s372 = sshll.u32 [#allocation9], 4
          %s373 = int_to_ptr.vmem [resolvable:$true] %s372
          %378 = dma.hbm_to_vmem [thread:$0]  %s3, 2048, %s373, [#allocation8], 64, 64, 4
        $region24: #{tpu_custom_call.1} parent=11 // pred_fallthru
          _
        // Predicated region
        $region25: #{tpu_custom_call.1} parent=11 // pred_check
          %p379 = pneg %p155
        $region26: #{tpu_custom_call.1} parent=11 // pred_check_branch
          %381 = sbr.rel (%p379) target = $region28
        $region27: #{tpu_custom_call.1} parent=11 // pred_region
          _
        $region28: #{tpu_custom_call.1} parent=11 // pred_fallthru
          _
        // Predicated region
        $region29: #{tpu_custom_call.1} parent=11 // pred_check
          %p382 = pneg %p176
        $region30: #{tpu_custom_call.1} parent=11 // pred_check_branch
          %384 = sbr.rel (%p382) target = $region32
        $region31: #{tpu_custom_call.1} parent=11 // pred_region
          %s386 = ssub.s32 2048, 2048
          %387 = vsyncadd [#allocation11], %s386
          %s388 = sshll.u32 [#allocation10], 4
          %s389 = int_to_ptr.vmem [resolvable:$true] %s388
          %394 = dma.hbm_to_vmem [thread:$0]  %s5, 2048, %s389, [#allocation11], 128, 128, 8
        $region32: #{tpu_custom_call.1} parent=11 // pred_fallthru
          _
        // Predicated region
        $region33: #{tpu_custom_call.1} parent=11 // pred_check
          %p395 = pneg %p197
        $region34: #{tpu_custom_call.1} parent=11 // pred_check_branch
          %397 = sbr.rel (%p395) target = $region36
        $region35: #{tpu_custom_call.1} parent=11 // pred_region
          %s399 = ssub.s32 2048, 2048
          %400 = vsyncadd [#allocation11], %s399
          %s401 = sshll.u32 [#allocation12], 4
          %s402 = int_to_ptr.vmem [resolvable:$true] %s401
          %407 = dma.hbm_to_vmem [thread:$0]  %s6, 2048, %s402, [#allocation11], 128, 128, 8
        $region36: #{tpu_custom_call.1} parent=11 // pred_fallthru
          _
        // Predicated region
        $region37: #{tpu_custom_call.1} parent=11 // pred_check
          %p408 = pneg %p218
        $region38: #{tpu_custom_call.1} parent=11 // pred_check_branch
          %410 = sbr.rel (%p408) target = $region40
        $region39: #{tpu_custom_call.1} parent=11 // pred_region
          %s412 = ssub.s32 2048, 2048
          %413 = vsyncadd [#allocation14], %s412
          %s414 = sshll.u32 [#allocation13], 4
          %s415 = int_to_ptr.vmem [resolvable:$true] %s414
          %420 = dma.hbm_to_vmem [thread:$0]  %s7, 2048, %s415, [#allocation14], 128, 128, 8
        $region40: #{tpu_custom_call.1} parent=11 // pred_fallthru
          _
        // Predicated region
        $region41: #{tpu_custom_call.1} parent=11 // pred_check
          %p421 = pneg %p239
        $region42: #{tpu_custom_call.1} parent=11 // pred_check_branch
          %423 = sbr.rel (%p421) target = $region44
        $region43: #{tpu_custom_call.1} parent=11 // pred_region
          _
        $region44: #{tpu_custom_call.1} parent=11 // pred_fallthru
          _
        // Predicated region
        $region45: #{tpu_custom_call.1} parent=11 // pred_check
          %p424 = pneg %p260
        $region46: #{tpu_custom_call.1} parent=11 // pred_check_branch
          %426 = sbr.rel (%p424) target = $region48
        $region47: #{tpu_custom_call.1} parent=11 // pred_region
          %s428 = ssub.s32 2048, 2048
          %429 = vsyncadd [#allocation14], %s428
          %s430 = sshll.u32 [#allocation15], 4
          %s431 = int_to_ptr.vmem [resolvable:$true] %s430
          %436 = dma.hbm_to_vmem [thread:$0]  %s9, 2048, %s431, [#allocation14], 128, 128, 8
        $region48: #{tpu_custom_call.1} parent=11 // pred_fallthru
          _
        // Predicated region
        $region49: #{tpu_custom_call.1} parent=11 // pred_check
          %p437 = pneg %p281
        $region50: #{tpu_custom_call.1} parent=11 // pred_check_branch
          %439 = sbr.rel (%p437) target = $region52
        $region51: #{tpu_custom_call.1} parent=11 // pred_region
          _
        $region52: #{tpu_custom_call.1} parent=11 // pred_fallthru
          _
      $region12: #{tpu_custom_call.1} parent=5 // pred_fallthru
        _
      %p440 = scmp.lt.s32.totalorder %s31, 4
      // Predicated region
      $region53: #{tpu_custom_call.1} parent=5 // pred_check
        %p441 = pneg %p440
      $region54: #{tpu_custom_call.1} parent=5 // pred_check_branch
        %443 = sbr.rel (%p441) target = $region56
      $region55: #{tpu_custom_call.1} parent=5 // pred_region
        // Predicated region
        $region57: #{tpu_custom_call.1} parent=55 // pred_check
          %p444 = pneg %p65
        $region58: #{tpu_custom_call.1} parent=55 // pred_check_branch
          %446 = sbr.rel (%p444) target = $region60
        $region59: #{tpu_custom_call.1} parent=55 // pred_region
          %s447 = sand.u32 %s55, 1
          %s448 = scalar_lea.sflag [#allocation5], %s447
          %s449 = sand.u32 %s55, 1
          %s450 = smul.addr %s449, 12
          %s451 = scalar_lea.vmem [#allocation4], %s450
          %s453 = ssub.s32 192, 192
          %454 = vsyncadd %s448, %s453
          %s455 = smul.addr %s39, 6
          %s456 = smul.addr %s38, 6
          %s457 = sadd.s32 %s455, %s456
          %s458 = smul.addr %s457, 32
          %s459 = scalar_lea.hbm %s0, %s458
          %s461 = sshll.u32 %s451, 4
          %s462 = int_to_ptr.vmem [resolvable:$true] %s461
          %464 = dma.hbm_to_vmem [thread:$0]  %s459, 192, %s462, %s448
        $region60: #{tpu_custom_call.1} parent=55 // pred_fallthru
          _
      $region56: #{tpu_custom_call.1} parent=5 // pred_fallthru
        _
      %p465 = scmp.le.s32.totalorder 1, %s31
      %p466 = scmp.lt.s32.totalorder %s31, 5
      %p467 = pnand %p465, %p466
      %p468 = pneg %p467
      // Predicated region
      $region61: #{tpu_custom_call.1} parent=5 // pred_check
        _
      $region62: #{tpu_custom_call.1} parent=5 // pred_check_branch
        %470 = sbr.rel (%p467) target = $region64
      $region63: #{tpu_custom_call.1} parent=5 // pred_region
        %s471 = ssub.s32 %s31, 1
        %s472 = sand.u32 %s58, 1
        %s473 = scalar_lea.sflag [#allocation5], %s472
        %s474 = sand.u32 %s58, 1
        %s475 = smul.addr %s474, 12
        %s476 = scalar_lea.vmem [#allocation4], %s475
        // Predicated region
        $region65: #{tpu_custom_call.1} parent=63 // pred_check
          %p477 = pneg %p71
        $region66: #{tpu_custom_call.1} parent=63 // pred_check_branch
          %479 = sbr.rel (%p477) target = $region68
        $region67: #{tpu_custom_call.1} parent=63 // pred_region
          %480 = dma.done %s473, 192
        $region68: #{tpu_custom_call.1} parent=63 // pred_fallthru
          _
        // Predicated region
        $region69: #{tpu_custom_call.1} parent=63 // pred_check
          %p481 = pneg %p92
        $region70: #{tpu_custom_call.1} parent=63 // pred_check_branch
          %483 = sbr.rel (%p481) target = $region72
        $region71: #{tpu_custom_call.1} parent=63 // pred_region
          %484 = dma.done [#allocation8], 12288
        $region72: #{tpu_custom_call.1} parent=63 // pred_fallthru
          _
        // Predicated region
        $region73: #{tpu_custom_call.1} parent=63 // pred_check
          %p485 = pneg %p134
        $region74: #{tpu_custom_call.1} parent=63 // pred_check_branch
          %487 = sbr.rel (%p485) target = $region76
        $region75: #{tpu_custom_call.1} parent=63 // pred_region
          %488 = dma.done [#allocation8], 2048
        $region76: #{tpu_custom_call.1} parent=63 // pred_fallthru
          _
        // Predicated region
        $region77: #{tpu_custom_call.1} parent=63 // pred_check
          %p489 = pneg %p176
        $region78: #{tpu_custom_call.1} parent=63 // pred_check_branch
          %491 = sbr.rel (%p489) target = $region80
        $region79: #{tpu_custom_call.1} parent=63 // pred_region
          %492 = dma.done [#allocation11], 2048
        $region80: #{tpu_custom_call.1} parent=63 // pred_fallthru
          _
        // Predicated region
        $region81: #{tpu_custom_call.1} parent=63 // pred_check
          %p493 = pneg %p197
        $region82: #{tpu_custom_call.1} parent=63 // pred_check_branch
          %495 = sbr.rel (%p493) target = $region84
        $region83: #{tpu_custom_call.1} parent=63 // pred_region
          %496 = dma.done [#allocation11], 2048
        $region84: #{tpu_custom_call.1} parent=63 // pred_fallthru
          _
        // Predicated region
        $region85: #{tpu_custom_call.1} parent=63 // pred_check
          %p497 = pneg %p218
        $region86: #{tpu_custom_call.1} parent=63 // pred_check_branch
          %499 = sbr.rel (%p497) target = $region88
        $region87: #{tpu_custom_call.1} parent=63 // pred_region
          %500 = dma.done [#allocation14], 2048
        $region88: #{tpu_custom_call.1} parent=63 // pred_fallthru
          _
        // Predicated region
        $region89: #{tpu_custom_call.1} parent=63 // pred_check
          %p501 = pneg %p260
        $region90: #{tpu_custom_call.1} parent=63 // pred_check_branch
          %503 = sbr.rel (%p501) target = $region92
        $region91: #{tpu_custom_call.1} parent=63 // pred_region
          %504 = dma.done [#allocation14], 2048
        $region92: #{tpu_custom_call.1} parent=63 // pred_fallthru
          _
        %s505 = sand.u32 %s58, 1
        %s506 = scalar_lea.sflag [#allocation5], %s505
        %s507 = sand.u32 %s58, 1
        %s508 = smul.addr %s507, 12
        %s509 = scalar_lea.vmem [#allocation4], %s508
        %p510 = pneg %p71
        %p511 = pneg %p68
        %p512 = pneg %p92
        %p513 = pneg %p89
        %p514 = pneg %p113
        %p515 = pneg %p110
        %p516 = pneg %p134
        %p517 = pneg %p131
        %p518 = pneg %p155
        %p519 = pneg %p152
        %p520 = pneg %p176
        %p521 = pneg %p173
        %p522 = pneg %p197
        %p523 = pneg %p194
        %p524 = pneg %p218
        %p525 = pneg %p215
        %p526 = pneg %p239
        %p527 = pneg %p236
        %p528 = pneg %p260
        %p529 = pneg %p257
        %p530 = pneg %p281
        %p531 = pneg %p278
        %p532 = pneg %p309
        %p533 = pneg %p306
        %s534 = sand.u32 %s296, 1
        %s535 = scalar_lea.sflag [#allocation6], %s534
        %s536 = sand.u32 %s296, 1
        %s537 = smul.addr %s536, 4
        %s538 = scalar_lea.vmem [#allocation16], %s537
        %p539 = pneg %p335
        %p540 = pneg %p332
        %s541 = sand.u32 %s322, 1
        %s542 = scalar_lea.sflag [#allocation18], %s541
        %s543 = sand.u32 %s322, 1
        %s544 = smul.addr %s543, 8
        %s545 = scalar_lea.vmem [#allocation17], %s544
        %v547 = vld [vmem:[%s476] sm:$0xff]
        %v548 = vld [vmem:[%s476 + $0x8] sm:$0xf]
        %v549 = vld [vmem:[#allocation7] sm:$0xff]
        %v550 = vld [vmem:[#allocation7 + $0x8] sm:$0xff]
        %v551 = vld [vmem:[#allocation7 + $0x10] sm:$0xff]
        %v552 = vld [vmem:[#allocation7 + $0x18] sm:$0xff]
        %v553 = vld [vmem:[#allocation7 + $0x20] sm:$0xff]
        %v554 = vld [vmem:[#allocation7 + $0x28] sm:$0xff]
        %v555 = vld [vmem:[#allocation7 + $0x30] sm:$0xff]
        %v556 = vld [vmem:[#allocation7 + $0x38] sm:$0xff]
        %v557 = vld [vmem:[#allocation7 + $0x40] sm:$0xff]
        %v558 = vld [vmem:[#allocation7 + $0x48] sm:$0xff]
        %v559 = vld [vmem:[#allocation7 + $0x50] sm:$0xff]
        %v560 = vld [vmem:[#allocation7 + $0x58] sm:$0xff]
        %v561 = vld [vmem:[#allocation7 + $0x60] sm:$0xff]
        %v562 = vld [vmem:[#allocation7 + $0x68] sm:$0xff]
        %v563 = vld [vmem:[#allocation7 + $0x70] sm:$0xff]
        %v564 = vld [vmem:[#allocation7 + $0x78] sm:$0xff]
        %v565 = vld [vmem:[#allocation7 + $0x80] sm:$0xff]
        %v566 = vld [vmem:[#allocation7 + $0x88] sm:$0xff]
        %v567 = vld [vmem:[#allocation7 + $0x90] sm:$0xff]
        %v568 = vld [vmem:[#allocation7 + $0x98] sm:$0xff]
        %v569 = vld [vmem:[#allocation7 + $0xa0] sm:$0xff]
        %v570 = vld [vmem:[#allocation7 + $0xa8] sm:$0xff]
        %v571 = vld [vmem:[#allocation7 + $0xb0] sm:$0xff]
        %v572 = vld [vmem:[#allocation7 + $0xb8] sm:$0xff]
        %v573 = vld [vmem:[#allocation7 + $0xc0] sm:$0xff]
        %v574 = vld [vmem:[#allocation7 + $0xc8] sm:$0xff]
        %v575 = vld [vmem:[#allocation7 + $0xd0] sm:$0xff]
        %v576 = vld [vmem:[#allocation7 + $0xd8] sm:$0xff]
        %v577 = vld [vmem:[#allocation7 + $0xe0] sm:$0xff]
        %v578 = vld [vmem:[#allocation7 + $0xe8] sm:$0xff]
        %v579 = vld [vmem:[#allocation7 + $0xf0] sm:$0xff]
        %v580 = vld [vmem:[#allocation7 + $0xf8] sm:$0xff]
        %v581 = vld [vmem:[#allocation7 + $0x100] sm:$0xff]
        %v582 = vld [vmem:[#allocation7 + $0x108] sm:$0xff]
        %v583 = vld [vmem:[#allocation7 + $0x110] sm:$0xff]
        %v584 = vld [vmem:[#allocation7 + $0x118] sm:$0xff]
        %v585 = vld [vmem:[#allocation7 + $0x120] sm:$0xff]
        %v586 = vld [vmem:[#allocation7 + $0x128] sm:$0xff]
        %v587 = vld [vmem:[#allocation7 + $0x130] sm:$0xff]
        %v588 = vld [vmem:[#allocation7 + $0x138] sm:$0xff]
        %v589 = vld [vmem:[#allocation7 + $0x140] sm:$0xff]
        %v590 = vld [vmem:[#allocation7 + $0x148] sm:$0xff]
        %v591 = vld [vmem:[#allocation7 + $0x150] sm:$0xff]
        %v592 = vld [vmem:[#allocation7 + $0x158] sm:$0xff]
        %v593 = vld [vmem:[#allocation7 + $0x160] sm:$0xff]
        %v594 = vld [vmem:[#allocation7 + $0x168] sm:$0xff]
        %v595 = vld [vmem:[#allocation7 + $0x170] sm:$0xff]
        %v596 = vld [vmem:[#allocation7 + $0x178] sm:$0xff]
        %v597 = vld [vmem:[#allocation7 + $0x180] sm:$0xff]
        %v598 = vld [vmem:[#allocation7 + $0x188] sm:$0xff]
        %v599 = vld [vmem:[#allocation7 + $0x190] sm:$0xff]
        %v600 = vld [vmem:[#allocation7 + $0x198] sm:$0xff]
        %v601 = vld [vmem:[#allocation7 + $0x1a0] sm:$0xff]
        %v602 = vld [vmem:[#allocation7 + $0x1a8] sm:$0xff]
        %v603 = vld [vmem:[#allocation7 + $0x1b0] sm:$0xff]
        %v604 = vld [vmem:[#allocation7 + $0x1b8] sm:$0xff]
        %v605 = vld [vmem:[#allocation7 + $0x1c0] sm:$0xff]
        %v606 = vld [vmem:[#allocation7 + $0x1c8] sm:$0xff]
        %v607 = vld [vmem:[#allocation7 + $0x1d0] sm:$0xff]
        %v608 = vld [vmem:[#allocation7 + $0x1d8] sm:$0xff]
        %v609 = vld [vmem:[#allocation7 + $0x1e0] sm:$0xff]
        %v610 = vld [vmem:[#allocation7 + $0x1e8] sm:$0xff]
        %v611 = vld [vmem:[#allocation7 + $0x1f0] sm:$0xff]
        %v612 = vld [vmem:[#allocation7 + $0x1f8] sm:$0xff]
        %v613 = vld [vmem:[#allocation7 + $0x200] sm:$0xff]
        %v614 = vld [vmem:[#allocation7 + $0x208] sm:$0xff]
        %v615 = vld [vmem:[#allocation7 + $0x210] sm:$0xff]
        %v616 = vld [vmem:[#allocation7 + $0x218] sm:$0xff]
        %v617 = vld [vmem:[#allocation7 + $0x220] sm:$0xff]
        %v618 = vld [vmem:[#allocation7 + $0x228] sm:$0xff]
        %v619 = vld [vmem:[#allocation7 + $0x230] sm:$0xff]
        %v620 = vld [vmem:[#allocation7 + $0x238] sm:$0xff]
        %v621 = vld [vmem:[#allocation7 + $0x240] sm:$0xff]
        %v622 = vld [vmem:[#allocation7 + $0x248] sm:$0xff]
        %v623 = vld [vmem:[#allocation7 + $0x250] sm:$0xff]
        %v624 = vld [vmem:[#allocation7 + $0x258] sm:$0xff]
        %v625 = vld [vmem:[#allocation7 + $0x260] sm:$0xff]
        %v626 = vld [vmem:[#allocation7 + $0x268] sm:$0xff]
        %v627 = vld [vmem:[#allocation7 + $0x270] sm:$0xff]
        %v628 = vld [vmem:[#allocation7 + $0x278] sm:$0xff]
        %v629 = vld [vmem:[#allocation7 + $0x280] sm:$0xff]
        %v630 = vld [vmem:[#allocation7 + $0x288] sm:$0xff]
        %v631 = vld [vmem:[#allocation7 + $0x290] sm:$0xff]
        %v632 = vld [vmem:[#allocation7 + $0x298] sm:$0xff]
        %v633 = vld [vmem:[#allocation7 + $0x2a0] sm:$0xff]
        %v634 = vld [vmem:[#allocation7 + $0x2a8] sm:$0xff]
        %v635 = vld [vmem:[#allocation7 + $0x2b0] sm:$0xff]
        %v636 = vld [vmem:[#allocation7 + $0x2b8] sm:$0xff]
        %v637 = vld [vmem:[#allocation7 + $0x2c0] sm:$0xff]
        %v638 = vld [vmem:[#allocation7 + $0x2c8] sm:$0xff]
        %v639 = vld [vmem:[#allocation7 + $0x2d0] sm:$0xff]
        %v640 = vld [vmem:[#allocation7 + $0x2d8] sm:$0xff]
        %v641 = vld [vmem:[#allocation7 + $0x2e0] sm:$0xff]
        %v642 = vld [vmem:[#allocation7 + $0x2e8] sm:$0xff]
        %v643 = vld [vmem:[#allocation7 + $0x2f0] sm:$0xff]
        %v644 = vld [vmem:[#allocation7 + $0x2f8] sm:$0xff]
        %v645 = vld [vmem:[%s2] sm:$0x3]
        %v647 = vlaneseq
        %v648 = vshrl.u32 %v647, 7
        %v649 = vsub.s32 0, %v648
        %v650 = vrot.slane %v645, %v649
        %v651 = vlaneseq
        %v652 = vshrl.u32 %v651, 7
        %v653 = vsub.s32 1, %v652
        %v654 = vrot.slane %v645, %v653
        %v659 = vcombine.high %v547, %v547
        %v661 = vunpack.c.l.s4 1983009808
        %v662 = vunpack.c.0.s8 %v661
        %v663 = vlaneseq
        %v664 = vshrl.u32 %v663, 7
        %v665 = vsub.s32 %v662, %v664
        %v666 = vrot.slane %v547, %v665
        %v668 = vunpack.c.l.s4 1983009808
        %v669 = vunpack.c.0.s8 %v668
        %v670 = vlaneseq
        %v671 = vshrl.u32 %v670, 7
        %v672 = vsub.s32 %v669, %v671
        %v673 = vrot.slane %v659, %v672
        %v674 = vcombine.high %v666, %v666
        %v675 = vcombine.high %v673, %v673
        %v677 = vunpack.c.l.s4 1983009808
        %v678 = vunpack.c.0.s8 %v677
        %v679 = vlaneseq
        %v680 = vshrl.u32 %v679, 7
        %v681 = vsub.s32 %v678, %v680
        %v682 = vrot.slane %v548, %v681
        %v683 = vcombine.high %v682, %v682
        %v786 = vunpack.c.l.b16 %v549
        %v787 = vunpack.c.h.b16 %v549
        %v788 = vunpack.c.l.b16 %v550
        %v789 = vunpack.c.h.b16 %v550
        %v790 = vunpack.c.l.b16 %v551
        %v791 = vunpack.c.h.b16 %v551
        %v792 = vunpack.c.l.b16 %v552
        %v793 = vunpack.c.h.b16 %v552
        %v794 = vunpack.c.l.b16 %v553
        %v795 = vunpack.c.h.b16 %v553
        %v796 = vunpack.c.l.b16 %v554
        %v797 = vunpack.c.h.b16 %v554
        %v798 = vunpack.c.l.b16 %v555
        %v799 = vunpack.c.h.b16 %v555
        %v800 = vunpack.c.l.b16 %v556
        %v801 = vunpack.c.h.b16 %v556
        %v802 = vunpack.c.l.b16 %v557
        %v803 = vunpack.c.h.b16 %v557
        %v804 = vunpack.c.l.b16 %v558
        %v805 = vunpack.c.h.b16 %v558
        %v806 = vunpack.c.l.b16 %v559
        %v807 = vunpack.c.h.b16 %v559
        %v808 = vunpack.c.l.b16 %v560
        %v809 = vunpack.c.h.b16 %v560
        %v810 = vunpack.c.l.b16 %v561
        %v811 = vunpack.c.h.b16 %v561
        %v812 = vunpack.c.l.b16 %v562
        %v813 = vunpack.c.h.b16 %v562
        %v814 = vunpack.c.l.b16 %v563
        %v815 = vunpack.c.h.b16 %v563
        %v816 = vunpack.c.l.b16 %v564
        %v817 = vunpack.c.h.b16 %v564
        %v818 = vunpack.c.l.b16 %v565
        %v819 = vunpack.c.h.b16 %v565
        %v820 = vunpack.c.l.b16 %v566
        %v821 = vunpack.c.h.b16 %v566
        %v822 = vunpack.c.l.b16 %v567
        %v823 = vunpack.c.h.b16 %v567
        %v824 = vunpack.c.l.b16 %v568
        %v825 = vunpack.c.h.b16 %v568
        %v826 = vunpack.c.l.b16 %v569
        %v827 = vunpack.c.h.b16 %v569
        %v828 = vunpack.c.l.b16 %v570
        %v829 = vunpack.c.h.b16 %v570
        %v830 = vunpack.c.l.b16 %v571
        %v831 = vunpack.c.h.b16 %v571
        %v832 = vunpack.c.l.b16 %v572
        %v833 = vunpack.c.h.b16 %v572
        %v834 = vunpack.c.l.b16 %v573
        %v835 = vunpack.c.h.b16 %v573
        %v836 = vunpack.c.l.b16 %v574
        %v837 = vunpack.c.h.b16 %v574
        %v838 = vunpack.c.l.b16 %v575
        %v839 = vunpack.c.h.b16 %v575
        %v840 = vunpack.c.l.b16 %v576
        %v841 = vunpack.c.h.b16 %v576
        %v842 = vunpack.c.l.b16 %v577
        %v843 = vunpack.c.h.b16 %v577
        %v844 = vunpack.c.l.b16 %v578
        %v845 = vunpack.c.h.b16 %v578
        %v846 = vunpack.c.l.b16 %v579
        %v847 = vunpack.c.h.b16 %v579
        %v848 = vunpack.c.l.b16 %v580
        %v849 = vunpack.c.h.b16 %v580
        %v850 = vunpack.c.l.b16 %v581
        %v851 = vunpack.c.h.b16 %v581
        %v852 = vunpack.c.l.b16 %v582
        %v853 = vunpack.c.h.b16 %v582
        %v854 = vunpack.c.l.b16 %v583
        %v855 = vunpack.c.h.b16 %v583
        %v856 = vunpack.c.l.b16 %v584
        %v857 = vunpack.c.h.b16 %v584
        %v858 = vunpack.c.l.b16 %v585
        %v859 = vunpack.c.h.b16 %v585
        %v860 = vunpack.c.l.b16 %v586
        %v861 = vunpack.c.h.b16 %v586
        %v862 = vunpack.c.l.b16 %v587
        %v863 = vunpack.c.h.b16 %v587
        %v864 = vunpack.c.l.b16 %v588
        %v865 = vunpack.c.h.b16 %v588
        %v866 = vunpack.c.l.b16 %v589
        %v867 = vunpack.c.h.b16 %v589
        %v868 = vunpack.c.l.b16 %v590
        %v869 = vunpack.c.h.b16 %v590
        %v870 = vunpack.c.l.b16 %v591
        %v871 = vunpack.c.h.b16 %v591
        %v872 = vunpack.c.l.b16 %v592
        %v873 = vunpack.c.h.b16 %v592
        %v874 = vunpack.c.l.b16 %v593
        %v875 = vunpack.c.h.b16 %v593
        %v876 = vunpack.c.l.b16 %v594
        %v877 = vunpack.c.h.b16 %v594
        %v878 = vunpack.c.l.b16 %v595
        %v879 = vunpack.c.h.b16 %v595
        %v880 = vunpack.c.l.b16 %v596
        %v881 = vunpack.c.h.b16 %v596
        %v882 = vunpack.c.l.b16 %v597
        %v883 = vunpack.c.h.b16 %v597
        %v884 = vunpack.c.l.b16 %v598
        %v885 = vunpack.c.h.b16 %v598
        %v886 = vunpack.c.l.b16 %v599
        %v887 = vunpack.c.h.b16 %v599
        %v888 = vunpack.c.l.b16 %v600
        %v889 = vunpack.c.h.b16 %v600
        %v890 = vunpack.c.l.b16 %v601
        %v891 = vunpack.c.h.b16 %v601
        %v892 = vunpack.c.l.b16 %v602
        %v893 = vunpack.c.h.b16 %v602
        %v894 = vunpack.c.l.b16 %v603
        %v895 = vunpack.c.h.b16 %v603
        %v896 = vunpack.c.l.b16 %v604
        %v897 = vunpack.c.h.b16 %v604
        %v898 = vunpack.c.l.b16 %v605
        %v899 = vunpack.c.h.b16 %v605
        %v900 = vunpack.c.l.b16 %v606
        %v901 = vunpack.c.h.b16 %v606
        %v902 = vunpack.c.l.b16 %v607
        %v903 = vunpack.c.h.b16 %v607
        %v904 = vunpack.c.l.b16 %v608
        %v905 = vunpack.c.h.b16 %v608
        %v906 = vunpack.c.l.b16 %v609
        %v907 = vunpack.c.h.b16 %v609
        %v908 = vunpack.c.l.b16 %v610
        %v909 = vunpack.c.h.b16 %v610
        %v910 = vunpack.c.l.b16 %v611
        %v911 = vunpack.c.h.b16 %v611
        %v912 = vunpack.c.l.b16 %v612
        %v913 = vunpack.c.h.b16 %v612
        %v914 = vunpack.c.l.b16 %v613
        %v915 = vunpack.c.h.b16 %v613
        %v916 = vunpack.c.l.b16 %v614
        %v917 = vunpack.c.h.b16 %v614
        %v918 = vunpack.c.l.b16 %v615
        %v919 = vunpack.c.h.b16 %v615
        %v920 = vunpack.c.l.b16 %v616
        %v921 = vunpack.c.h.b16 %v616
        %v922 = vunpack.c.l.b16 %v617
        %v923 = vunpack.c.h.b16 %v617
        %v924 = vunpack.c.l.b16 %v618
        %v925 = vunpack.c.h.b16 %v618
        %v926 = vunpack.c.l.b16 %v619
        %v927 = vunpack.c.h.b16 %v619
        %v928 = vunpack.c.l.b16 %v620
        %v929 = vunpack.c.h.b16 %v620
        %v930 = vunpack.c.l.b16 %v621
        %v931 = vunpack.c.h.b16 %v621
        %v932 = vunpack.c.l.b16 %v622
        %v933 = vunpack.c.h.b16 %v622
        %v934 = vunpack.c.l.b16 %v623
        %v935 = vunpack.c.h.b16 %v623
        %v936 = vunpack.c.l.b16 %v624
        %v937 = vunpack.c.h.b16 %v624
        %v938 = vunpack.c.l.b16 %v625
        %v939 = vunpack.c.h.b16 %v625
        %v940 = vunpack.c.l.b16 %v626
        %v941 = vunpack.c.h.b16 %v626
        %v942 = vunpack.c.l.b16 %v627
        %v943 = vunpack.c.h.b16 %v627
        %v944 = vunpack.c.l.b16 %v628
        %v945 = vunpack.c.h.b16 %v628
        %v946 = vunpack.c.l.b16 %v629
        %v947 = vunpack.c.h.b16 %v629
        %v948 = vunpack.c.l.b16 %v630
        %v949 = vunpack.c.h.b16 %v630
        %v950 = vunpack.c.l.b16 %v631
        %v951 = vunpack.c.h.b16 %v631
        %v952 = vunpack.c.l.b16 %v632
        %v953 = vunpack.c.h.b16 %v632
        %v954 = vunpack.c.l.b16 %v633
        %v955 = vunpack.c.h.b16 %v633
        %v956 = vunpack.c.l.b16 %v634
        %v957 = vunpack.c.h.b16 %v634
        %v958 = vunpack.c.l.b16 %v635
        %v959 = vunpack.c.h.b16 %v635
        %v960 = vunpack.c.l.b16 %v636
        %v961 = vunpack.c.h.b16 %v636
        %v962 = vunpack.c.l.b16 %v637
        %v963 = vunpack.c.h.b16 %v637
        %v964 = vunpack.c.l.b16 %v638
        %v965 = vunpack.c.h.b16 %v638
        %v966 = vunpack.c.l.b16 %v639
        %v967 = vunpack.c.h.b16 %v639
        %v968 = vunpack.c.l.b16 %v640
        %v969 = vunpack.c.h.b16 %v640
        %v970 = vunpack.c.l.b16 %v641
        %v971 = vunpack.c.h.b16 %v641
        %v972 = vunpack.c.l.b16 %v642
        %v973 = vunpack.c.h.b16 %v642
        %v974 = vunpack.c.l.b16 %v643
        %v975 = vunpack.c.h.b16 %v643
        %v976 = vunpack.c.l.b16 %v644
        %v977 = vunpack.c.h.b16 %v644
        %v978 = vpack.c.b16 %v788, %v786
        %v979 = vpack.c.b16 %v789, %v787
        %v980 = vpack.c.b16 %v792, %v790
        %v981 = vpack.c.b16 %v793, %v791
        %v982 = vpack.c.b16 %v796, %v794
        %v983 = vpack.c.b16 %v797, %v795
        %v984 = vpack.c.b16 %v800, %v798
        %v985 = vpack.c.b16 %v801, %v799
        %v986 = vpack.c.b16 %v804, %v802
        %v987 = vpack.c.b16 %v805, %v803
        %v988 = vpack.c.b16 %v808, %v806
        %v989 = vpack.c.b16 %v809, %v807
        %v990 = vpack.c.b16 %v812, %v810
        %v991 = vpack.c.b16 %v813, %v811
        %v992 = vpack.c.b16 %v816, %v814
        %v993 = vpack.c.b16 %v817, %v815
        %v994 = vpack.c.b16 %v820, %v818
        %v995 = vpack.c.b16 %v821, %v819
        %v996 = vpack.c.b16 %v824, %v822
        %v997 = vpack.c.b16 %v825, %v823
        %v998 = vpack.c.b16 %v828, %v826
        %v999 = vpack.c.b16 %v829, %v827
        %v1000 = vpack.c.b16 %v832, %v830
        %v1001 = vpack.c.b16 %v833, %v831
        %v1002 = vpack.c.b16 %v836, %v834
        %v1003 = vpack.c.b16 %v837, %v835
        %v1004 = vpack.c.b16 %v840, %v838
        %v1005 = vpack.c.b16 %v841, %v839
        %v1006 = vpack.c.b16 %v844, %v842
        %v1007 = vpack.c.b16 %v845, %v843
        %v1008 = vpack.c.b16 %v848, %v846
        %v1009 = vpack.c.b16 %v849, %v847
        %v1010 = vpack.c.b16 %v852, %v850
        %v1011 = vpack.c.b16 %v853, %v851
        %v1012 = vpack.c.b16 %v856, %v854
        %v1013 = vpack.c.b16 %v857, %v855
        %v1014 = vpack.c.b16 %v860, %v858
        %v1015 = vpack.c.b16 %v861, %v859
        %v1016 = vpack.c.b16 %v864, %v862
        %v1017 = vpack.c.b16 %v865, %v863
        %v1018 = vpack.c.b16 %v868, %v866
        %v1019 = vpack.c.b16 %v869, %v867
        %v1020 = vpack.c.b16 %v872, %v870
        %v1021 = vpack.c.b16 %v873, %v871
        %v1022 = vpack.c.b16 %v876, %v874
        %v1023 = vpack.c.b16 %v877, %v875
        %v1024 = vpack.c.b16 %v880, %v878
        %v1025 = vpack.c.b16 %v881, %v879
        %v1026 = vpack.c.b16 %v884, %v882
        %v1027 = vpack.c.b16 %v885, %v883
        %v1028 = vpack.c.b16 %v888, %v886
        %v1029 = vpack.c.b16 %v889, %v887
        %v1030 = vpack.c.b16 %v892, %v890
        %v1031 = vpack.c.b16 %v893, %v891
        %v1032 = vpack.c.b16 %v896, %v894
        %v1033 = vpack.c.b16 %v897, %v895
        %v1034 = vpack.c.b16 %v900, %v898
        %v1035 = vpack.c.b16 %v901, %v899
        %v1036 = vpack.c.b16 %v904, %v902
        %v1037 = vpack.c.b16 %v905, %v903
        %v1038 = vpack.c.b16 %v908, %v906
        %v1039 = vpack.c.b16 %v909, %v907
        %v1040 = vpack.c.b16 %v912, %v910
        %v1041 = vpack.c.b16 %v913, %v911
        %v1042 = vpack.c.b16 %v916, %v914
        %v1043 = vpack.c.b16 %v917, %v915
        %v1044 = vpack.c.b16 %v920, %v918
        %v1045 = vpack.c.b16 %v921, %v919
        %v1046 = vpack.c.b16 %v924, %v922
        %v1047 = vpack.c.b16 %v925, %v923
        %v1048 = vpack.c.b16 %v928, %v926
        %v1049 = vpack.c.b16 %v929, %v927
        %v1050 = vpack.c.b16 %v932, %v930
        %v1051 = vpack.c.b16 %v933, %v931
        %v1052 = vpack.c.b16 %v936, %v934
        %v1053 = vpack.c.b16 %v937, %v935
        %v1054 = vpack.c.b16 %v940, %v938
        %v1055 = vpack.c.b16 %v941, %v939
        %v1056 = vpack.c.b16 %v944, %v942
        %v1057 = vpack.c.b16 %v945, %v943
        %v1058 = vpack.c.b16 %v948, %v946
        %v1059 = vpack.c.b16 %v949, %v947
        %v1060 = vpack.c.b16 %v952, %v950
        %v1061 = vpack.c.b16 %v953, %v951
        %v1062 = vpack.c.b16 %v956, %v954
        %v1063 = vpack.c.b16 %v957, %v955
        %v1064 = vpack.c.b16 %v960, %v958
        %v1065 = vpack.c.b16 %v961, %v959
        %v1066 = vpack.c.b16 %v964, %v962
        %v1067 = vpack.c.b16 %v965, %v963
        %v1068 = vpack.c.b16 %v968, %v966
        %v1069 = vpack.c.b16 %v969, %v967
        %v1070 = vpack.c.b16 %v972, %v970
        %v1071 = vpack.c.b16 %v973, %v971
        %v1072 = vpack.c.b16 %v976, %v974
        %v1073 = vpack.c.b16 %v977, %v975
        %1170 = vmatprep.subr.bf16.mxu0 %v979
        %1171 = vmatpush1.bf16.msra.mxu0 %v978
        %1172 = vmatprep.subr.bf16.mxu0 %v981
        %1173 = vmatpush1.bf16.msra.mxu0 %v980
        %1174 = vmatprep.subr.bf16.mxu0 %v983
        %1175 = vmatpush1.bf16.msra.mxu0 %v982
        %1176 = vmatprep.subr.bf16.mxu0 %v985
        %1177 = vmatpush1.bf16.msra.mxu0 %v984
        %1178 = vmatprep.subr.bf16.mxu0 %v987
        %1179 = vmatpush1.bf16.msra.mxu0 %v986
        %1180 = vmatprep.subr.bf16.mxu0 %v989
        %1181 = vmatpush1.bf16.msra.mxu0 %v988
        %1182 = vmatprep.subr.bf16.mxu0 %v991
        %1183 = vmatpush1.bf16.msra.mxu0 %v990
        %1184 = vmatprep.subr.bf16.mxu0 %v993
        %1185 = vmatpush1.bf16.msra.mxu0 %v992
        %1186 = vmatprep.subr.bf16.mxu0 %v995
        %1187 = vmatpush1.bf16.msra.mxu0 %v994
        %1188 = vmatprep.subr.bf16.mxu0 %v997
        %1189 = vmatpush1.bf16.msra.mxu0 %v996
        %1190 = vmatprep.subr.bf16.mxu0 %v999
        %1191 = vmatpush1.bf16.msra.mxu0 %v998
        %1192 = vmatprep.subr.bf16.mxu0 %v1001
        %1193 = vmatpush1.bf16.msra.mxu0 %v1000
        %1194 = vmatprep.subr.bf16.mxu0 %v1003
        %1195 = vmatpush1.bf16.msra.mxu0 %v1002
        %1196 = vmatprep.subr.bf16.mxu0 %v1005
        %1197 = vmatpush1.bf16.msra.mxu0 %v1004
        %1198 = vmatprep.subr.bf16.mxu0 %v1007
        %1199 = vmatpush1.bf16.msra.mxu0 %v1006
        %1200 = vmatprep.subr.bf16.mxu0 %v1009
        %1201 = vmatpush1.bf16.msra.mxu0 %v1008
        %1202 = vmatprep.mubr.bf16.mxu0 %v674
        %1203 = vmatmul.mubr.bf16.gmra.mrb[0].mxu0 %v666
        %v1204 = vpop.f32.mrb[0].mxu0
        %v1205 = vadd.f32 %v650, %v1204
        %v1206 = vpop.f32.mrb[0].mxu0
        %v1207 = vadd.f32 %v654, %v1206
        %v1208 = vpop.f32.mrb[0].mxu0
        %v1209 = vpop.f32.mrb[0].mxu0
        %1210 = vdwg.mxu0
        %1211 = vmatprep.subr.bf16.mxu0 %v1011
        %1212 = vmatpush1.bf16.msra.mxu0 %v1010
        %1213 = vmatprep.subr.bf16.mxu0 %v1013
        %1214 = vmatpush1.bf16.msra.mxu0 %v1012
        %1215 = vmatprep.subr.bf16.mxu0 %v1015
        %1216 = vmatpush1.bf16.msra.mxu0 %v1014
        %1217 = vmatprep.subr.bf16.mxu0 %v1017
        %1218 = vmatpush1.bf16.msra.mxu0 %v1016
        %1219 = vmatprep.subr.bf16.mxu0 %v1019
        %1220 = vmatpush1.bf16.msra.mxu0 %v1018
        %1221 = vmatprep.subr.bf16.mxu0 %v1021
        %1222 = vmatpush1.bf16.msra.mxu0 %v1020
        %1223 = vmatprep.subr.bf16.mxu0 %v1023
        %1224 = vmatpush1.bf16.msra.mxu0 %v1022
        %1225 = vmatprep.subr.bf16.mxu0 %v1025
        %1226 = vmatpush1.bf16.msra.mxu0 %v1024
        %1227 = vmatprep.subr.bf16.mxu0 %v1027
        %1228 = vmatpush1.bf16.msra.mxu0 %v1026
        %1229 = vmatprep.subr.bf16.mxu0 %v1029
        %1230 = vmatpush1.bf16.msra.mxu0 %v1028
        %1231 = vmatprep.subr.bf16.mxu0 %v1031
        %1232 = vmatpush1.bf16.msra.mxu0 %v1030
        %1233 = vmatprep.subr.bf16.mxu0 %v1033
        %1234 = vmatpush1.bf16.msra.mxu0 %v1032
        %1235 = vmatprep.subr.bf16.mxu0 %v1035
        %1236 = vmatpush1.bf16.msra.mxu0 %v1034
        %1237 = vmatprep.subr.bf16.mxu0 %v1037
        %1238 = vmatpush1.bf16.msra.mxu0 %v1036
        %1239 = vmatprep.subr.bf16.mxu0 %v1039
        %1240 = vmatpush1.bf16.msra.mxu0 %v1038
        %1241 = vmatprep.subr.bf16.mxu0 %v1041
        %1242 = vmatpush1.bf16.msra.mxu0 %v1040
        %1243 = vmatprep.mubr.bf16.mxu0 %v675
        %1244 = vmatmul.mubr.bf16.gmra.mrb[0].mxu0 %v673
        %v1245 = vpop.f32.mrb[0].mxu0
        %v1246 = vadd.f32 %v1205, %v1245
        %v1247 = vpop.f32.mrb[0].mxu0
        %v1248 = vadd.f32 %v1207, %v1247
        %v1249 = vpop.f32.mrb[0].mxu0
        %v1250 = vpop.f32.mrb[0].mxu0
        %1251 = vdwg.mxu0
        %1252 = vmatprep.subr.bf16.mxu0 %v1043
        %1253 = vmatpush1.bf16.msra.mxu0 %v1042
        %1254 = vmatprep.subr.bf16.mxu0 %v1045
        %1255 = vmatpush1.bf16.msra.mxu0 %v1044
        %1256 = vmatprep.subr.bf16.mxu0 %v1047
        %1257 = vmatpush1.bf16.msra.mxu0 %v1046
        %1258 = vmatprep.subr.bf16.mxu0 %v1049
        %1259 = vmatpush1.bf16.msra.mxu0 %v1048
        %1260 = vmatprep.subr.bf16.mxu0 %v1051
        %1261 = vmatpush1.bf16.msra.mxu0 %v1050
        %1262 = vmatprep.subr.bf16.mxu0 %v1053
        %1263 = vmatpush1.bf16.msra.mxu0 %v1052
        %1264 = vmatprep.subr.bf16.mxu0 %v1055
        %1265 = vmatpush1.bf16.msra.mxu0 %v1054
        %1266 = vmatprep.subr.bf16.mxu0 %v1057
        %1267 = vmatpush1.bf16.msra.mxu0 %v1056
        %1268 = vmatprep.subr.bf16.mxu0 %v1059
        %1269 = vmatpush1.bf16.msra.mxu0 %v1058
        %1270 = vmatprep.subr.bf16.mxu0 %v1061
        %1271 = vmatpush1.bf16.msra.mxu0 %v1060
        %1272 = vmatprep.subr.bf16.mxu0 %v1063
        %1273 = vmatpush1.bf16.msra.mxu0 %v1062
        %1274 = vmatprep.subr.bf16.mxu0 %v1065
        %1275 = vmatpush1.bf16.msra.mxu0 %v1064
        %1276 = vmatprep.subr.bf16.mxu0 %v1067
        %1277 = vmatpush1.bf16.msra.mxu0 %v1066
        %1278 = vmatprep.subr.bf16.mxu0 %v1069
        %1279 = vmatpush1.bf16.msra.mxu0 %v1068
        %1280 = vmatprep.subr.bf16.mxu0 %v1071
        %1281 = vmatpush1.bf16.msra.mxu0 %v1070
        %1282 = vmatprep.subr.bf16.mxu0 %v1073
        %1283 = vmatpush1.bf16.msra.mxu0 %v1072
        %1284 = vmatprep.mubr.bf16.mxu0 %v683
        %1285 = vmatmul.mubr.bf16.gmra.mrb[0].mxu0 %v682
        %v1286 = vpop.f32.mrb[0].mxu0
        %v1287 = vadd.f32 %v1246, %v1286
        %v1288 = vpop.f32.mrb[0].mxu0
        %v1289 = vadd.f32 %v1248, %v1288
        %v1290 = vpop.f32.mrb[0].mxu0
        %v1291 = vpop.f32.mrb[0].mxu0
        %1292 = vdwg.mxu0
        %v1293 = vmax.f32 %v1287, 0.0
        %v1294 = vmax.f32 %v1289, 0.0
        %v1295 = vpack.c.bf16 %v1293, %v1293
        %v1296 = vpack.c.bf16 %v1294, %v1294
        %v1297 = vld [vmem:[#allocation9] sm:$0xf]
        %v1298 = vld [vmem:[#allocation9 + $0x4] sm:$0xf]
        %v1299 = vld [vmem:[#allocation9 + $0x8] sm:$0xf]
        %v1300 = vld [vmem:[#allocation9 + $0xc] sm:$0xf]
        %v1301 = vld [vmem:[#allocation9 + $0x10] sm:$0xf]
        %v1302 = vld [vmem:[#allocation9 + $0x14] sm:$0xf]
        %v1303 = vld [vmem:[#allocation9 + $0x18] sm:$0xf]
        %v1304 = vld [vmem:[#allocation9 + $0x1c] sm:$0xf]
        %v1305 = vld [vmem:[#allocation9 + $0x20] sm:$0xf]
        %v1306 = vld [vmem:[#allocation9 + $0x24] sm:$0xf]
        %v1307 = vld [vmem:[#allocation9 + $0x28] sm:$0xf]
        %v1308 = vld [vmem:[#allocation9 + $0x2c] sm:$0xf]
        %v1309 = vld [vmem:[#allocation9 + $0x30] sm:$0xf]
        %v1310 = vld [vmem:[#allocation9 + $0x34] sm:$0xf]
        %v1311 = vld [vmem:[#allocation9 + $0x38] sm:$0xf]
        %v1312 = vld [vmem:[#allocation9 + $0x3c] sm:$0xf]
        %v1313 = vld [vmem:[#allocation9 + $0x40] sm:$0xf]
        %v1314 = vld [vmem:[#allocation9 + $0x44] sm:$0xf]
        %v1315 = vld [vmem:[#allocation9 + $0x48] sm:$0xf]
        %v1316 = vld [vmem:[#allocation9 + $0x4c] sm:$0xf]
        %v1317 = vld [vmem:[#allocation9 + $0x50] sm:$0xf]
        %v1318 = vld [vmem:[#allocation9 + $0x54] sm:$0xf]
        %v1319 = vld [vmem:[#allocation9 + $0x58] sm:$0xf]
        %v1320 = vld [vmem:[#allocation9 + $0x5c] sm:$0xf]
        %v1321 = vld [vmem:[#allocation9 + $0x60] sm:$0xf]
        %v1322 = vld [vmem:[#allocation9 + $0x64] sm:$0xf]
        %v1323 = vld [vmem:[#allocation9 + $0x68] sm:$0xf]
        %v1324 = vld [vmem:[#allocation9 + $0x6c] sm:$0xf]
        %v1325 = vld [vmem:[#allocation9 + $0x70] sm:$0xf]
        %v1326 = vld [vmem:[#allocation9 + $0x74] sm:$0xf]
        %v1327 = vld [vmem:[#allocation9 + $0x78] sm:$0xf]
        %v1328 = vld [vmem:[#allocation9 + $0x7c] sm:$0xf]
        %v1329 = vld [vmem:[%s4] sm:$0x1]
        %v1331 = vlaneseq
        %v1332 = vshrl.u32 %v1331, 7
        %v1333 = vsub.s32 0, %v1332
        %v1334 = vrot.slane %v1329, %v1333
        %v1368 = vunpack.c.l.b16 %v1297
        %v1369 = vunpack.c.l.b16 %v1298
        %v1370 = vunpack.c.l.b16 %v1299
        %v1371 = vunpack.c.l.b16 %v1300
        %v1372 = vunpack.c.l.b16 %v1301
        %v1373 = vunpack.c.l.b16 %v1302
        %v1374 = vunpack.c.l.b16 %v1303
        %v1375 = vunpack.c.l.b16 %v1304
        %v1376 = vunpack.c.l.b16 %v1305
        %v1377 = vunpack.c.l.b16 %v1306
        %v1378 = vunpack.c.l.b16 %v1307
        %v1379 = vunpack.c.l.b16 %v1308
        %v1380 = vunpack.c.l.b16 %v1309
        %v1381 = vunpack.c.l.b16 %v1310
        %v1382 = vunpack.c.l.b16 %v1311
        %v1383 = vunpack.c.l.b16 %v1312
        %v1384 = vunpack.c.l.b16 %v1313
        %v1385 = vunpack.c.l.b16 %v1314
        %v1386 = vunpack.c.l.b16 %v1315
        %v1387 = vunpack.c.l.b16 %v1316
        %v1388 = vunpack.c.l.b16 %v1317
        %v1389 = vunpack.c.l.b16 %v1318
        %v1390 = vunpack.c.l.b16 %v1319
        %v1391 = vunpack.c.l.b16 %v1320
        %v1392 = vunpack.c.l.b16 %v1321
        %v1393 = vunpack.c.l.b16 %v1322
        %v1394 = vunpack.c.l.b16 %v1323
        %v1395 = vunpack.c.l.b16 %v1324
        %v1396 = vunpack.c.l.b16 %v1325
        %v1397 = vunpack.c.l.b16 %v1326
        %v1398 = vunpack.c.l.b16 %v1327
        %v1399 = vunpack.c.l.b16 %v1328
        %v1400 = vpack.c.b16 %v1369, %v1368
        %v1401 = vpack.c.b16 %v1371, %v1370
        %v1402 = vpack.c.b16 %v1373, %v1372
        %v1403 = vpack.c.b16 %v1375, %v1374
        %v1404 = vpack.c.b16 %v1377, %v1376
        %v1405 = vpack.c.b16 %v1379, %v1378
        %v1406 = vpack.c.b16 %v1381, %v1380
        %v1407 = vpack.c.b16 %v1383, %v1382
        %v1408 = vpack.c.b16 %v1385, %v1384
        %v1409 = vpack.c.b16 %v1387, %v1386
        %v1410 = vpack.c.b16 %v1389, %v1388
        %v1411 = vpack.c.b16 %v1391, %v1390
        %v1412 = vpack.c.b16 %v1393, %v1392
        %v1413 = vpack.c.b16 %v1395, %v1394
        %v1414 = vpack.c.b16 %v1397, %v1396
        %v1415 = vpack.c.b16 %v1399, %v1398
        %1432 = vmatprep.subr.bf16.mxu0 0
        %1433 = vmatpush1.bf16.msra.mxu0 %v1400
        %1434 = vmatprep.subr.bf16.mxu0 0
        %1435 = vmatpush1.bf16.msra.mxu0 %v1401
        %1436 = vmatprep.subr.bf16.mxu0 0
        %1437 = vmatpush1.bf16.msra.mxu0 %v1402
        %1438 = vmatprep.subr.bf16.mxu0 0
        %1439 = vmatpush1.bf16.msra.mxu0 %v1403
        %1440 = vmatprep.subr.bf16.mxu0 0
        %1441 = vmatpush1.bf16.msra.mxu0 %v1404
        %1442 = vmatprep.subr.bf16.mxu0 0
        %1443 = vmatpush1.bf16.msra.mxu0 %v1405
        %1444 = vmatprep.subr.bf16.mxu0 0
        %1445 = vmatpush1.bf16.msra.mxu0 %v1406
        %1446 = vmatprep.subr.bf16.mxu0 0
        %1447 = vmatpush1.bf16.msra.mxu0 %v1407
        %1448 = vmatprep.subr.bf16.mxu0 0
        %1449 = vmatpush1.bf16.msra.mxu0 %v1408
        %1450 = vmatprep.subr.bf16.mxu0 0
        %1451 = vmatpush1.bf16.msra.mxu0 %v1409
        %1452 = vmatprep.subr.bf16.mxu0 0
        %1453 = vmatpush1.bf16.msra.mxu0 %v1410
        %1454 = vmatprep.subr.bf16.mxu0 0
        %1455 = vmatpush1.bf16.msra.mxu0 %v1411
        %1456 = vmatprep.subr.bf16.mxu0 0
        %1457 = vmatpush1.bf16.msra.mxu0 %v1412
        %1458 = vmatprep.subr.bf16.mxu0 0
        %1459 = vmatpush1.bf16.msra.mxu0 %v1413
        %1460 = vmatprep.subr.bf16.mxu0 0
        %1461 = vmatpush1.bf16.msra.mxu0 %v1414
        %1462 = vmatprep.subr.bf16.mxu0 0
        %1463 = vmatpush1.bf16.msra.mxu0 %v1415
        %1464 = vmatprep.mubr.bf16.mxu0 %v1296
        %1465 = vmatmul.mubr.bf16.gmra.mrb[0].mxu0 %v1295
        %v1466 = vpop.f32.mrb[0].mxu0
        %v1467 = vadd.f32 %v1334, %v1466
        %v1468 = vpop.f32.mrb[0].mxu0
        %v1469 = vpop.f32.mrb[0].mxu0
        %v1470 = vpop.f32.mrb[0].mxu0
        %1471 = vdwg.mxu0
        %v1472 = vmax.f32 %v1467, 0.0
        %1473 = vst [vmem:[%s538] sm:$0xf] %v1472
        %p1474 = scmp.eq.s32.totalorder %s41, 0
        // Predicated region
        $region93: #{tpu_custom_call.1} parent=63 // pred_check
          %p1475 = pneg %p1474
        $region94: #{tpu_custom_call.1} parent=63 // pred_check_branch
          %1477 = sbr.rel (%p1475) target = $region96
        $region95: #{tpu_custom_call.1} parent=63 // pred_region
          %1478 = vst [vmem:[#allocation2] sm:$0x1] 0.0
          %1479 = vst [vmem:[#allocation3] sm:$0x1] 0.0
        $region96: #{tpu_custom_call.1} parent=63 // pred_fallthru
          _
        %v1480 = vld [vmem:[#allocation2] sm:$0x1]
        %vm1481 = vcmask 1043456
        %v1482 = vsel %vm1481, %v1472, 0.0
        %v1483 = vrot.slane %v1482, 4
        %v1484 = vadd.f32 %v1482, %v1483
        %v1485 = vrot.slane %v1484, 2
        %v1486 = vadd.f32 %v1484, %v1485
        %v1487 = vrot.slane %v1486, 1
        %v1488 = vadd.f32 %v1486, %v1487
        %v1489 = vadd.f32 %v1480, %v1488
        %1490 = vst [vmem:[#allocation2] sm:$0x1] %v1489
        %v1491 = vld [vmem:[#allocation3] sm:$0x1]
        %v1492 = vmul.f32 %v1472, %v1472
        %v1493 = vsel %vm1481, %v1492, 0.0
        %v1494 = vrot.slane %v1493, 4
        %v1495 = vadd.f32 %v1493, %v1494
        %v1496 = vrot.slane %v1495, 2
        %v1497 = vadd.f32 %v1495, %v1496
        %v1498 = vrot.slane %v1497, 1
        %v1499 = vadd.f32 %v1497, %v1498
        %v1500 = vadd.f32 %v1491, %v1499
        %1501 = vst [vmem:[#allocation3] sm:$0x1] %v1500
        // Predicated region
        $region97: #{tpu_custom_call.1} parent=63 // pred_check
          %p1502 = pneg %p1474
        $region98: #{tpu_custom_call.1} parent=63 // pred_check_branch
          %1504 = sbr.rel (%p1502) target = $region100
        $region99: #{tpu_custom_call.1} parent=63 // pred_region
          %v1505 = vld [vmem:[#allocation2] sm:$0x1]
          %v1506 = vld [vmem:[#allocation10] sm:$0xff]
          %v1507 = vld [vmem:[#allocation10 + $0x8] sm:$0xff]
          %v1508 = vld [vmem:[#allocation10 + $0x10] sm:$0xff]
          %v1509 = vld [vmem:[#allocation10 + $0x18] sm:$0xff]
          %v1510 = vld [vmem:[#allocation10 + $0x20] sm:$0xff]
          %v1511 = vld [vmem:[#allocation10 + $0x28] sm:$0xff]
          %v1512 = vld [vmem:[#allocation10 + $0x30] sm:$0xff]
          %v1513 = vld [vmem:[#allocation10 + $0x38] sm:$0xff]
          %v1514 = vld [vmem:[#allocation10 + $0x40] sm:$0xff]
          %v1515 = vld [vmem:[#allocation10 + $0x48] sm:$0xff]
          %v1516 = vld [vmem:[#allocation10 + $0x50] sm:$0xff]
          %v1517 = vld [vmem:[#allocation10 + $0x58] sm:$0xff]
          %v1518 = vld [vmem:[#allocation10 + $0x60] sm:$0xff]
          %v1519 = vld [vmem:[#allocation10 + $0x68] sm:$0xff]
          %v1520 = vld [vmem:[#allocation10 + $0x70] sm:$0xff]
          %v1521 = vld [vmem:[#allocation10 + $0x78] sm:$0xff]
          %1522 = vmatprep.subr.mxu0 0.0
          %1523 = vmatpush1.msra.mxu0 %v1506
          %1524 = vmatprep.subr.mxu0 0.0
          %1525 = vmatpush1.msra.mxu0 %v1507
          %1526 = vmatprep.subr.mxu0 0.0
          %1527 = vmatpush1.msra.mxu0 %v1508
          %1528 = vmatprep.subr.mxu0 0.0
          %1529 = vmatpush1.msra.mxu0 %v1509
          %1530 = vmatprep.subr.mxu0 0.0
          %1531 = vmatpush1.msra.mxu0 %v1510
          %1532 = vmatprep.subr.mxu0 0.0
          %1533 = vmatpush1.msra.mxu0 %v1511
          %1534 = vmatprep.subr.mxu0 0.0
          %1535 = vmatpush1.msra.mxu0 %v1512
          %1536 = vmatprep.subr.mxu0 0.0
          %1537 = vmatpush1.msra.mxu0 %v1513
          %1538 = vmatprep.subr.mxu0 0.0
          %1539 = vmatpush1.msra.mxu0 %v1514
          %1540 = vmatprep.subr.mxu0 0.0
          %1541 = vmatpush1.msra.mxu0 %v1515
          %1542 = vmatprep.subr.mxu0 0.0
          %1543 = vmatpush1.msra.mxu0 %v1516
          %1544 = vmatprep.subr.mxu0 0.0
          %1545 = vmatpush1.msra.mxu0 %v1517
          %1546 = vmatprep.subr.mxu0 0.0
          %1547 = vmatpush1.msra.mxu0 %v1518
          %1548 = vmatprep.subr.mxu0 0.0
          %1549 = vmatpush1.msra.mxu0 %v1519
          %1550 = vmatprep.subr.mxu0 0.0
          %1551 = vmatpush1.msra.mxu0 %v1520
          %1552 = vmatprep.subr.mxu0 0.0
          %1553 = vmatpush1.msra.mxu0 %v1521
          %1554 = vmatprep.subr.mxu0 0.0
          %1555 = vmatpush1.msra.mxu0 0.0
          %1556 = vmatprep.subr.mxu0 0.0
          %1557 = vmatpush1.msra.mxu0 0.0
          %1558 = vmatprep.subr.mxu0 0.0
          %1559 = vmatpush1.msra.mxu0 0.0
          %1560 = vmatprep.subr.mxu0 0.0
          %1561 = vmatpush1.msra.mxu0 0.0
          %1562 = vmatprep.subr.mxu0 0.0
          %1563 = vmatpush1.msra.mxu0 0.0
          %1564 = vmatprep.subr.mxu0 0.0
          %1565 = vmatpush1.msra.mxu0 0.0
          %1566 = vmatprep.subr.mxu0 0.0
          %1567 = vmatpush1.msra.mxu0 0.0
          %1568 = vmatprep.subr.mxu0 0.0
          %1569 = vmatpush1.msra.mxu0 0.0
          %1570 = vmatprep.subr.mxu0 0.0
          %1571 = vmatpush1.msra.mxu0 0.0
          %1572 = vmatprep.subr.mxu0 0.0
          %1573 = vmatpush1.msra.mxu0 0.0
          %1574 = vmatprep.subr.mxu0 0.0
          %1575 = vmatpush1.msra.mxu0 0.0
          %1576 = vmatprep.subr.mxu0 0.0
          %1577 = vmatpush1.msra.mxu0 0.0
          %1578 = vmatprep.subr.mxu0 0.0
          %1579 = vmatpush1.msra.mxu0 0.0
          %1580 = vmatprep.subr.mxu0 0.0
          %1581 = vmatpush1.msra.mxu0 0.0
          %1582 = vmatprep.subr.mxu0 0.0
          %1583 = vmatpush1.msra.mxu0 0.0
          %1584 = vmatprep.subr.mxu0 0.0
          %1585 = vmatpush1.msra.mxu0 0.0
          %1586 = vmatprep.mubr.f32.mxu0 0.0
          %1587 = vmatmul.mubr.f32.gmra.mrb[0].mxu0 %v1505
          %v1588 = vpop.f32.mrb[0].mxu0
          %v1589 = vadd.f32 0.0, %v1588
          %v1590 = vpop.f32.mrb[0].mxu0
          %1591 = vdwg.mxu0
          %v1592 = vld [vmem:[#allocation3] sm:$0x1]
          %1593 = vmatprep.subr.mxu0 0.0
          %1594 = vmatpush1.msra.mxu0 %v1506
          %1595 = vmatprep.subr.mxu0 0.0
          %1596 = vmatpush1.msra.mxu0 %v1507
          %1597 = vmatprep.subr.mxu0 0.0
          %1598 = vmatpush1.msra.mxu0 %v1508
          %1599 = vmatprep.subr.mxu0 0.0
          %1600 = vmatpush1.msra.mxu0 %v1509
          %1601 = vmatprep.subr.mxu0 0.0
          %1602 = vmatpush1.msra.mxu0 %v1510
          %1603 = vmatprep.subr.mxu0 0.0
          %1604 = vmatpush1.msra.mxu0 %v1511
          %1605 = vmatprep.subr.mxu0 0.0
          %1606 = vmatpush1.msra.mxu0 %v1512
          %1607 = vmatprep.subr.mxu0 0.0
          %1608 = vmatpush1.msra.mxu0 %v1513
          %1609 = vmatprep.subr.mxu0 0.0
          %1610 = vmatpush1.msra.mxu0 %v1514
          %1611 = vmatprep.subr.mxu0 0.0
          %1612 = vmatpush1.msra.mxu0 %v1515
          %1613 = vmatprep.subr.mxu0 0.0
          %1614 = vmatpush1.msra.mxu0 %v1516
          %1615 = vmatprep.subr.mxu0 0.0
          %1616 = vmatpush1.msra.mxu0 %v1517
          %1617 = vmatprep.subr.mxu0 0.0
          %1618 = vmatpush1.msra.mxu0 %v1518
          %1619 = vmatprep.subr.mxu0 0.0
          %1620 = vmatpush1.msra.mxu0 %v1519
          %1621 = vmatprep.subr.mxu0 0.0
          %1622 = vmatpush1.msra.mxu0 %v1520
          %1623 = vmatprep.subr.mxu0 0.0
          %1624 = vmatpush1.msra.mxu0 %v1521
          %1625 = vmatprep.subr.mxu0 0.0
          %1626 = vmatpush1.msra.mxu0 0.0
          %1627 = vmatprep.subr.mxu0 0.0
          %1628 = vmatpush1.msra.mxu0 0.0
          %1629 = vmatprep.subr.mxu0 0.0
          %1630 = vmatpush1.msra.mxu0 0.0
          %1631 = vmatprep.subr.mxu0 0.0
          %1632 = vmatpush1.msra.mxu0 0.0
          %1633 = vmatprep.subr.mxu0 0.0
          %1634 = vmatpush1.msra.mxu0 0.0
          %1635 = vmatprep.subr.mxu0 0.0
          %1636 = vmatpush1.msra.mxu0 0.0
          %1637 = vmatprep.subr.mxu0 0.0
          %1638 = vmatpush1.msra.mxu0 0.0
          %1639 = vmatprep.subr.mxu0 0.0
          %1640 = vmatpush1.msra.mxu0 0.0
          %1641 = vmatprep.subr.mxu0 0.0
          %1642 = vmatpush1.msra.mxu0 0.0
          %1643 = vmatprep.subr.mxu0 0.0
          %1644 = vmatpush1.msra.mxu0 0.0
          %1645 = vmatprep.subr.mxu0 0.0
          %1646 = vmatpush1.msra.mxu0 0.0
          %1647 = vmatprep.subr.mxu0 0.0
          %1648 = vmatpush1.msra.mxu0 0.0
          %1649 = vmatprep.subr.mxu0 0.0
          %1650 = vmatpush1.msra.mxu0 0.0
          %1651 = vmatprep.subr.mxu0 0.0
          %1652 = vmatpush1.msra.mxu0 0.0
          %1653 = vmatprep.subr.mxu0 0.0
          %1654 = vmatpush1.msra.mxu0 0.0
          %1655 = vmatprep.subr.mxu0 0.0
          %1656 = vmatpush1.msra.mxu0 0.0
          %1657 = vmatprep.mubr.f32.mxu0 0.0
          %1658 = vmatmul.mubr.f32.gmra.mrb[0].mxu0 %v1592
          %v1659 = vpop.f32.mrb[0].mxu0
          %v1660 = vadd.f32 0.0, %v1659
          %v1661 = vpop.f32.mrb[0].mxu0
          %1662 = vdwg.mxu0
          %v1663 = vmul.f32 %v1589, 0.015625
          %v1664 = vmul.f32 %v1589, %v1663
          %v1665 = vsub.f32 %v1660, %v1664
          %v1666 = vmul.f32 %v1665, 0.015873017
          %v1667 = vld [vmem:[#allocation12] sm:$0xff]
          %v1668 = vld [vmem:[#allocation12 + $0x8] sm:$0xff]
          %v1669 = vld [vmem:[#allocation12 + $0x10] sm:$0xff]
          %v1670 = vld [vmem:[#allocation12 + $0x18] sm:$0xff]
          %v1671 = vld [vmem:[#allocation12 + $0x20] sm:$0xff]
          %v1672 = vld [vmem:[#allocation12 + $0x28] sm:$0xff]
          %v1673 = vld [vmem:[#allocation12 + $0x30] sm:$0xff]
          %v1674 = vld [vmem:[#allocation12 + $0x38] sm:$0xff]
          %v1675 = vld [vmem:[#allocation12 + $0x40] sm:$0xff]
          %v1676 = vld [vmem:[#allocation12 + $0x48] sm:$0xff]
          %v1677 = vld [vmem:[#allocation12 + $0x50] sm:$0xff]
          %v1678 = vld [vmem:[#allocation12 + $0x58] sm:$0xff]
          %v1679 = vld [vmem:[#allocation12 + $0x60] sm:$0xff]
          %v1680 = vld [vmem:[#allocation12 + $0x68] sm:$0xff]
          %v1681 = vld [vmem:[#allocation12 + $0x70] sm:$0xff]
          %v1682 = vld [vmem:[#allocation12 + $0x78] sm:$0xff]
          %v1683 = vld [vmem:[#allocation13] sm:$0xff]
          %v1684 = vld [vmem:[#allocation13 + $0x8] sm:$0xff]
          %v1685 = vld [vmem:[#allocation13 + $0x10] sm:$0xff]
          %v1686 = vld [vmem:[#allocation13 + $0x18] sm:$0xff]
          %v1687 = vld [vmem:[#allocation13 + $0x20] sm:$0xff]
          %v1688 = vld [vmem:[#allocation13 + $0x28] sm:$0xff]
          %v1689 = vld [vmem:[#allocation13 + $0x30] sm:$0xff]
          %v1690 = vld [vmem:[#allocation13 + $0x38] sm:$0xff]
          %v1691 = vld [vmem:[#allocation13 + $0x40] sm:$0xff]
          %v1692 = vld [vmem:[#allocation13 + $0x48] sm:$0xff]
          %v1693 = vld [vmem:[#allocation13 + $0x50] sm:$0xff]
          %v1694 = vld [vmem:[#allocation13 + $0x58] sm:$0xff]
          %v1695 = vld [vmem:[#allocation13 + $0x60] sm:$0xff]
          %v1696 = vld [vmem:[#allocation13 + $0x68] sm:$0xff]
          %v1697 = vld [vmem:[#allocation13 + $0x70] sm:$0xff]
          %v1698 = vld [vmem:[#allocation13 + $0x78] sm:$0xff]
          %1699 = vmatprep.subr.mxu0 0.0
          %1700 = vmatpush1.msra.mxu0 %v1683
          %1701 = vmatprep.subr.mxu0 0.0
          %1702 = vmatpush1.msra.mxu0 %v1684
          %1703 = vmatprep.subr.mxu0 0.0
          %1704 = vmatpush1.msra.mxu0 %v1685
          %1705 = vmatprep.subr.mxu0 0.0
          %1706 = vmatpush1.msra.mxu0 %v1686
          %1707 = vmatprep.subr.mxu0 0.0
          %1708 = vmatpush1.msra.mxu0 %v1687
          %1709 = vmatprep.subr.mxu0 0.0
          %1710 = vmatpush1.msra.mxu0 %v1688
          %1711 = vmatprep.subr.mxu0 0.0
          %1712 = vmatpush1.msra.mxu0 %v1689
          %1713 = vmatprep.subr.mxu0 0.0
          %1714 = vmatpush1.msra.mxu0 %v1690
          %1715 = vmatprep.subr.mxu0 0.0
          %1716 = vmatpush1.msra.mxu0 %v1691
          %1717 = vmatprep.subr.mxu0 0.0
          %1718 = vmatpush1.msra.mxu0 %v1692
          %1719 = vmatprep.subr.mxu0 0.0
          %1720 = vmatpush1.msra.mxu0 %v1693
          %1721 = vmatprep.subr.mxu0 0.0
          %1722 = vmatpush1.msra.mxu0 %v1694
          %1723 = vmatprep.subr.mxu0 0.0
          %1724 = vmatpush1.msra.mxu0 %v1695
          %1725 = vmatprep.subr.mxu0 0.0
          %1726 = vmatpush1.msra.mxu0 %v1696
          %1727 = vmatprep.subr.mxu0 0.0
          %1728 = vmatpush1.msra.mxu0 %v1697
          %1729 = vmatprep.subr.mxu0 0.0
          %1730 = vmatpush1.msra.mxu0 %v1698
          %1731 = vmatprep.subr.mxu0 0.0
          %1732 = vmatpush1.msra.mxu0 0.0
          %1733 = vmatprep.subr.mxu0 0.0
          %1734 = vmatpush1.msra.mxu0 0.0
          %1735 = vmatprep.subr.mxu0 0.0
          %1736 = vmatpush1.msra.mxu0 0.0
          %1737 = vmatprep.subr.mxu0 0.0
          %1738 = vmatpush1.msra.mxu0 0.0
          %1739 = vmatprep.subr.mxu0 0.0
          %1740 = vmatpush1.msra.mxu0 0.0
          %1741 = vmatprep.subr.mxu0 0.0
          %1742 = vmatpush1.msra.mxu0 0.0
          %1743 = vmatprep.subr.mxu0 0.0
          %1744 = vmatpush1.msra.mxu0 0.0
          %1745 = vmatprep.subr.mxu0 0.0
          %1746 = vmatpush1.msra.mxu0 0.0
          %1747 = vmatprep.subr.mxu0 0.0
          %1748 = vmatpush1.msra.mxu0 0.0
          %1749 = vmatprep.subr.mxu0 0.0
          %1750 = vmatpush1.msra.mxu0 0.0
          %1751 = vmatprep.subr.mxu0 0.0
          %1752 = vmatpush1.msra.mxu0 0.0
          %1753 = vmatprep.subr.mxu0 0.0
          %1754 = vmatpush1.msra.mxu0 0.0
          %1755 = vmatprep.subr.mxu0 0.0
          %1756 = vmatpush1.msra.mxu0 0.0
          %1757 = vmatprep.subr.mxu0 0.0
          %1758 = vmatpush1.msra.mxu0 0.0
          %1759 = vmatprep.subr.mxu0 0.0
          %1760 = vmatpush1.msra.mxu0 0.0
          %1761 = vmatprep.subr.mxu0 0.0
          %1762 = vmatpush1.msra.mxu0 0.0
          %1763 = vmatprep.mubr.f32.mxu0 0.0
          %1764 = vmatmul.mubr.f32.gmra.mrb[0].mxu0 %v1666
          %v1765 = vpop.f32.mrb[0].mxu0
          %v1766 = vadd.f32 0.0, %v1765
          %v1767 = vpop.f32.mrb[0].mxu0
          %1768 = vdwg.mxu0
          %1769 = vmatprep.subr.mxu0 0.0
          %1770 = vmatpush1.msra.mxu0 %v1667
          %1771 = vmatprep.subr.mxu0 0.0
          %1772 = vmatpush1.msra.mxu0 %v1668
          %1773 = vmatprep.subr.mxu0 0.0
          %1774 = vmatpush1.msra.mxu0 %v1669
          %1775 = vmatprep.subr.mxu0 0.0
          %1776 = vmatpush1.msra.mxu0 %v1670
          %1777 = vmatprep.subr.mxu0 0.0
          %1778 = vmatpush1.msra.mxu0 %v1671
          %1779 = vmatprep.subr.mxu0 0.0
          %1780 = vmatpush1.msra.mxu0 %v1672
          %1781 = vmatprep.subr.mxu0 0.0
          %1782 = vmatpush1.msra.mxu0 %v1673
          %1783 = vmatprep.subr.mxu0 0.0
          %1784 = vmatpush1.msra.mxu0 %v1674
          %1785 = vmatprep.subr.mxu0 0.0
          %1786 = vmatpush1.msra.mxu0 %v1675
          %1787 = vmatprep.subr.mxu0 0.0
          %1788 = vmatpush1.msra.mxu0 %v1676
          %1789 = vmatprep.subr.mxu0 0.0
          %1790 = vmatpush1.msra.mxu0 %v1677
          %1791 = vmatprep.subr.mxu0 0.0
          %1792 = vmatpush1.msra.mxu0 %v1678
          %1793 = vmatprep.subr.mxu0 0.0
          %1794 = vmatpush1.msra.mxu0 %v1679
          %1795 = vmatprep.subr.mxu0 0.0
          %1796 = vmatpush1.msra.mxu0 %v1680
          %1797 = vmatprep.subr.mxu0 0.0
          %1798 = vmatpush1.msra.mxu0 %v1681
          %1799 = vmatprep.subr.mxu0 0.0
          %1800 = vmatpush1.msra.mxu0 %v1682
          %1801 = vmatprep.subr.mxu0 0.0
          %1802 = vmatpush1.msra.mxu0 0.0
          %1803 = vmatprep.subr.mxu0 0.0
          %1804 = vmatpush1.msra.mxu0 0.0
          %1805 = vmatprep.subr.mxu0 0.0
          %1806 = vmatpush1.msra.mxu0 0.0
          %1807 = vmatprep.subr.mxu0 0.0
          %1808 = vmatpush1.msra.mxu0 0.0
          %1809 = vmatprep.subr.mxu0 0.0
          %1810 = vmatpush1.msra.mxu0 0.0
          %1811 = vmatprep.subr.mxu0 0.0
          %1812 = vmatpush1.msra.mxu0 0.0
          %1813 = vmatprep.subr.mxu0 0.0
          %1814 = vmatpush1.msra.mxu0 0.0
          %1815 = vmatprep.subr.mxu0 0.0
          %1816 = vmatpush1.msra.mxu0 0.0
          %1817 = vmatprep.subr.mxu0 0.0
          %1818 = vmatpush1.msra.mxu0 0.0
          %1819 = vmatprep.subr.mxu0 0.0
          %1820 = vmatpush1.msra.mxu0 0.0
          %1821 = vmatprep.subr.mxu0 0.0
          %1822 = vmatpush1.msra.mxu0 0.0
          %1823 = vmatprep.subr.mxu0 0.0
          %1824 = vmatpush1.msra.mxu0 0.0
          %1825 = vmatprep.subr.mxu0 0.0
          %1826 = vmatpush1.msra.mxu0 0.0
          %1827 = vmatprep.subr.mxu0 0.0
          %1828 = vmatpush1.msra.mxu0 0.0
          %1829 = vmatprep.subr.mxu0 0.0
          %1830 = vmatpush1.msra.mxu0 0.0
          %1831 = vmatprep.subr.mxu0 0.0
          %1832 = vmatpush1.msra.mxu0 0.0
          %1833 = vmatprep.mubr.f32.mxu0 0.0
          %1834 = vmatmul.mubr.f32.gmra.mrb[0].mxu0 %v1663
          %v1835 = vpop.f32.mrb[0].mxu0
          %v1836 = vadd.f32 %v1766, %v1835
          %v1837 = vpop.f32.mrb[0].mxu0
          %1838 = vdwg.mxu0
          %v1839 = vld [vmem:[%s8] sm:$0x1]
          %v1840 = vadd.f32 %v1836, %v1839
          %v1841 = vmax.f32 %v1840, 0.0
          %v1842 = vld [vmem:[#allocation15] sm:$0xff]
          %v1843 = vld [vmem:[#allocation15 + $0x8] sm:$0xff]
          %v1844 = vld [vmem:[#allocation15 + $0x10] sm:$0xff]
          %v1845 = vld [vmem:[#allocation15 + $0x18] sm:$0xff]
          %v1846 = vld [vmem:[#allocation15 + $0x20] sm:$0xff]
          %v1847 = vld [vmem:[#allocation15 + $0x28] sm:$0xff]
          %v1848 = vld [vmem:[#allocation15 + $0x30] sm:$0xff]
          %v1849 = vld [vmem:[#allocation15 + $0x38] sm:$0xff]
          %v1850 = vld [vmem:[#allocation15 + $0x40] sm:$0xff]
          %v1851 = vld [vmem:[#allocation15 + $0x48] sm:$0xff]
          %v1852 = vld [vmem:[#allocation15 + $0x50] sm:$0xff]
          %v1853 = vld [vmem:[#allocation15 + $0x58] sm:$0xff]
          %v1854 = vld [vmem:[#allocation15 + $0x60] sm:$0xff]
          %v1855 = vld [vmem:[#allocation15 + $0x68] sm:$0xff]
          %v1856 = vld [vmem:[#allocation15 + $0x70] sm:$0xff]
          %v1857 = vld [vmem:[#allocation15 + $0x78] sm:$0xff]
          %v1858 = vld [vmem:[%s10] sm:$0x1]
          %1859 = vmatprep.subr.mxu0 0.0
          %1860 = vmatpush1.msra.mxu0 %v1842
          %1861 = vmatprep.subr.mxu0 0.0
          %1862 = vmatpush1.msra.mxu0 %v1843
          %1863 = vmatprep.subr.mxu0 0.0
          %1864 = vmatpush1.msra.mxu0 %v1844
          %1865 = vmatprep.subr.mxu0 0.0
          %1866 = vmatpush1.msra.mxu0 %v1845
          %1867 = vmatprep.subr.mxu0 0.0
          %1868 = vmatpush1.msra.mxu0 %v1846
          %1869 = vmatprep.subr.mxu0 0.0
          %1870 = vmatpush1.msra.mxu0 %v1847
          %1871 = vmatprep.subr.mxu0 0.0
          %1872 = vmatpush1.msra.mxu0 %v1848
          %1873 = vmatprep.subr.mxu0 0.0
          %1874 = vmatpush1.msra.mxu0 %v1849
          %1875 = vmatprep.subr.mxu0 0.0
          %1876 = vmatpush1.msra.mxu0 %v1850
          %1877 = vmatprep.subr.mxu0 0.0
          %1878 = vmatpush1.msra.mxu0 %v1851
          %1879 = vmatprep.subr.mxu0 0.0
          %1880 = vmatpush1.msra.mxu0 %v1852
          %1881 = vmatprep.subr.mxu0 0.0
          %1882 = vmatpush1.msra.mxu0 %v1853
          %1883 = vmatprep.subr.mxu0 0.0
          %1884 = vmatpush1.msra.mxu0 %v1854
          %1885 = vmatprep.subr.mxu0 0.0
          %1886 = vmatpush1.msra.mxu0 %v1855
          %1887 = vmatprep.subr.mxu0 0.0
          %1888 = vmatpush1.msra.mxu0 %v1856
          %1889 = vmatprep.subr.mxu0 0.0
          %1890 = vmatpush1.msra.mxu0 %v1857
          %1891 = vmatprep.subr.mxu0 0.0
          %1892 = vmatpush1.msra.mxu0 0.0
          %1893 = vmatprep.subr.mxu0 0.0
          %1894 = vmatpush1.msra.mxu0 0.0
          %1895 = vmatprep.subr.mxu0 0.0
          %1896 = vmatpush1.msra.mxu0 0.0
          %1897 = vmatprep.subr.mxu0 0.0
          %1898 = vmatpush1.msra.mxu0 0.0
          %1899 = vmatprep.subr.mxu0 0.0
          %1900 = vmatpush1.msra.mxu0 0.0
          %1901 = vmatprep.subr.mxu0 0.0
          %1902 = vmatpush1.msra.mxu0 0.0
          %1903 = vmatprep.subr.mxu0 0.0
          %1904 = vmatpush1.msra.mxu0 0.0
          %1905 = vmatprep.subr.mxu0 0.0
          %1906 = vmatpush1.msra.mxu0 0.0
          %1907 = vmatprep.subr.mxu0 0.0
          %1908 = vmatpush1.msra.mxu0 0.0
          %1909 = vmatprep.subr.mxu0 0.0
          %1910 = vmatpush1.msra.mxu0 0.0
          %1911 = vmatprep.subr.mxu0 0.0
          %1912 = vmatpush1.msra.mxu0 0.0
          %1913 = vmatprep.subr.mxu0 0.0
          %1914 = vmatpush1.msra.mxu0 0.0
          %1915 = vmatprep.subr.mxu0 0.0
          %1916 = vmatpush1.msra.mxu0 0.0
          %1917 = vmatprep.subr.mxu0 0.0
          %1918 = vmatpush1.msra.mxu0 0.0
          %1919 = vmatprep.subr.mxu0 0.0
          %1920 = vmatpush1.msra.mxu0 0.0
          %1921 = vmatprep.subr.mxu0 0.0
          %1922 = vmatpush1.msra.mxu0 0.0
          %1923 = vmatprep.mubr.f32.mxu0 0.0
          %1924 = vmatmul.mubr.f32.gmra.mrb[0].mxu0 %v1841
          %v1925 = vpop.f32.mrb[0].mxu0
          %v1926 = vadd.f32 %v1858, %v1925
          %v1927 = vpop.f32.mrb[0].mxu0
          %1928 = vdwg.mxu0
          %v1929 = vlaneseq
          %v1930 = vshrl.u32 %v1929, 7
          %v1931 = vsub.s32 0, %v1930
          %v1932 = vrot.slane %v1926, %v1931
          %1933 = vst [vmem:[%s545] sm:$0xff] %v1932
        $region100: #{tpu_custom_call.1} parent=63 // pred_fallthru
          _
        %s1934 = sand.u32 %s296, 1
        %s1935 = scalar_lea.sflag [#allocation6], %s1934
        %s1936 = sand.u32 %s296, 1
        %s1937 = smul.addr %s1936, 4
        %s1938 = scalar_lea.vmem [#allocation16], %s1937
        %s1939 = sand.u32 %s322, 1
        %s1940 = scalar_lea.sflag [#allocation18], %s1939
        %s1941 = sand.u32 %s322, 1
        %s1942 = smul.addr %s1941, 8
        %s1943 = scalar_lea.vmem [#allocation17], %s1942
        // Predicated region
        $region101: #{tpu_custom_call.1} parent=63 // pred_check
          %p1944 = pneg %p306
        $region102: #{tpu_custom_call.1} parent=63 // pred_check_branch
          %1946 = sbr.rel (%p1944) target = $region104
        $region103: #{tpu_custom_call.1} parent=63 // pred_region
          %s1948 = ssub.s32 64, 64
          %1949 = vsyncadd %s1935, %s1948
          %s1950 = sadd.s32 %s41, %s40
          %s1951 = smul.addr %s1950, 64
          %s1952 = scalar_lea.hbm %s11, %s1951
          %s1954 = sshll.u32 %s1938, 4
          %s1955 = int_to_ptr.vmem [resolvable:$true] %s1954
          %1957 = dma.vmem_to_hbm [thread:$0]  %s1955, 64, %s1952, %s1935
        $region104: #{tpu_custom_call.1} parent=63 // pred_fallthru
          _
        // Predicated region
        $region105: #{tpu_custom_call.1} parent=63 // pred_check
          %p1958 = pneg %p332
        $region106: #{tpu_custom_call.1} parent=63 // pred_check_branch
          %1960 = sbr.rel (%p1958) target = $region108
        $region107: #{tpu_custom_call.1} parent=63 // pred_region
          %s1962 = ssub.s32 128, 128
          %1963 = vsyncadd %s1940, %s1962
          %s1964 = smul.addr %s40, 128
          %s1965 = scalar_lea.hbm %s12, %s1964
          %s1967 = sshll.u32 %s1943, 4
          %s1968 = int_to_ptr.vmem [resolvable:$true] %s1967
          %1970 = dma.vmem_to_hbm [thread:$0]  %s1968, 128, %s1965, %s1940
        $region108: #{tpu_custom_call.1} parent=63 // pred_fallthru
          _
      $region64: #{tpu_custom_call.1} parent=5 // pred_fallthru
        _
      %p1971 = scmp.le.s32.totalorder 2, %s31
      // Predicated region
      $region109: #{tpu_custom_call.1} parent=5 // pred_check
        %p1972 = pneg %p1971
      $region110: #{tpu_custom_call.1} parent=5 // pred_check_branch
        %1974 = sbr.rel (%p1972) target = $region112
      $region111: #{tpu_custom_call.1} parent=5 // pred_region
        %s1975 = ssub.s32 %s31, 2
        // Predicated region
        $region113: #{tpu_custom_call.1} parent=111 // pred_check
          %p1976 = pneg %p312
        $region114: #{tpu_custom_call.1} parent=111 // pred_check_branch
          %1978 = sbr.rel (%p1976) target = $region116
        $region115: #{tpu_custom_call.1} parent=111 // pred_region
          %s1979 = sand.u32 %s297, 1
          %s1980 = scalar_lea.sflag [#allocation6], %s1979
          %s1981 = sand.u32 %s297, 1
          %s1982 = smul.addr %s1981, 4
          %s1983 = scalar_lea.vmem [#allocation16], %s1982
          %1984 = dma.done %s1980, 64
        $region116: #{tpu_custom_call.1} parent=111 // pred_fallthru
          _
        // Predicated region
        $region117: #{tpu_custom_call.1} parent=111 // pred_check
          %p1985 = pneg %p338
        $region118: #{tpu_custom_call.1} parent=111 // pred_check_branch
          %1987 = sbr.rel (%p1985) target = $region120
        $region119: #{tpu_custom_call.1} parent=111 // pred_region
          %s1988 = sand.u32 %s323, 1
          %s1989 = scalar_lea.sflag [#allocation18], %s1988
          %s1990 = sand.u32 %s323, 1
          %s1991 = smul.addr %s1990, 8
          %s1992 = scalar_lea.vmem [#allocation17], %s1991
          %1993 = dma.done %s1989, 128
        $region120: #{tpu_custom_call.1} parent=111 // pred_fallthru
          _
      $region112: #{tpu_custom_call.1} parent=5 // pred_fallthru
        _
    $region6: #{tpu_custom_call.1} parent=1 // loop_footer
      %s35 = sadd.s32 1, %s31
    $region7: #{tpu_custom_call.1} parent=1 // loop_footer_branch
      %30 = sbr.rel target = $region3
    $region8: #{tpu_custom_call.1} parent=1 // loop_exit
      _
    %1994 = vsyncpa [#allocation5], 1
    %s1995 = scalar_lea.sflag [#allocation5], 1
    %1996 = vsyncpa %s1995, 1
    %1997 = vsyncpa [#allocation8], 1
    %1998 = vsyncpa [#allocation11], 1
    %1999 = vsyncpa [#allocation14], 1
    %2000 = vsyncpa [#allocation6], 1
    %s2001 = scalar_lea.sflag [#allocation6], 1
    %2002 = vsyncpa %s2001, 1
    %2003 = vsyncpa [#allocation18], 1
    %s2004 = scalar_lea.sflag [#allocation18], 1
    %2005 = vsyncpa %s2004, 1

</llo_original>
